<compile_context>
chip_gen: v6e
topology: v6e:2x2x1
jax: 0.10.0
libtpu: 0.0.40
codegen_flags: <defaults>
</compile_context>

<pallas_src>
import jax
import jax.numpy as jnp
from jax.experimental import pallas as pl
from jax.experimental.pallas import tpu as pltpu


def _round_up(n, m):
    return ((n + m - 1) // m) * m


def _cdiv(a, b):
    return (a + b - 1) // b


def el_charcnn_fc_kernel(ids_ref, emb_ref, w1_ref, b1_ref, w2_ref, b2_ref,
                         wfc_ref, bfc_ref, o_ref):
    M = ids_ref.shape[0]            # Bb * L flattened (batch*time) rows
    Vp, E = emb_ref.shape           # padded vocab rows, embedding size
    H = w1_ref.shape[1]             # hidden_filters
    O = w2_ref.shape[2]             # out_feature (== E)
    Bb = o_ref.shape[0]             # sequences in this block
    L = M // Bb                     # sequence length

    def rot(a, k):
        # out[i] = a[(i + k) % M] via the XLU rotate slot (no VMEM copies).
        # Rows that wrap across a sequence boundary only ever feed positions
        # t >= L - 8, which are dropped/masked below.  NOTE: the mask fill of
        # 0 is exact only because every valid value is post-ReLU (>= 0).
        if k == 0:
            return a
        return pltpu.roll(a, a.shape[0] - k, axis=0)

    # ---- embedding lookup: one-hot (M, Vp) x (Vp, E) matmul on the MXU ----
    ids = ids_ref[...]                                         # (M, 1) int32
    col = jax.lax.broadcasted_iota(jnp.int32, (M, Vp), 1)
    onehot = (col == ids).astype(jnp.bfloat16)                 # (M, Vp)
    x = jnp.dot(onehot, emb_ref[...],
                preferred_element_type=jnp.float32)            # (M, E) f32

    # ---- conv1: merged 3-tap matmul, (M, 3E) x (3E, H) ----
    xc = jnp.concatenate([x, rot(x, 1), rot(x, 2)], axis=-1)
    h1 = jnp.dot(xc.astype(jnp.bfloat16), w1_ref[...],
                 preferred_element_type=jnp.float32)
    h1 = jnp.maximum(h1 + b1_ref[...], 0.0)                    # (M, H) f32

    # ---- MaxPool1d(kernel=3, stride=1) ----
    p1 = jnp.maximum(jnp.maximum(h1, rot(h1, 1)), rot(h1, 2))  # (M, H) f32

    # ---- conv2: three accumulating K=H dots (no (M, 3H) lane concat) ----
    h2 = jnp.dot(p1.astype(jnp.bfloat16), w2_ref[0],
                 preferred_element_type=jnp.float32)
    h2 += jnp.dot(rot(p1, 1).astype(jnp.bfloat16), w2_ref[1],
                  preferred_element_type=jnp.float32)
    h2 += jnp.dot(rot(p1, 2).astype(jnp.bfloat16), w2_ref[2],
                  preferred_element_type=jnp.float32)
    h2 = jnp.maximum(h2 + b2_ref[...], 0.0)                    # (M, O) f32

    # ---- MaxPool1d(kernel=3, stride=1) ----
    p2 = jnp.maximum(jnp.maximum(h2, rot(h2, 1)), rot(h2, 2))  # (M, O) f32

    # ---- global max over the valid output window t in [0, L-8) ----
    Lv = L - 8
    p2r = p2.reshape(Bb, L, O)
    if Lv % 8 == 0:
        feat = jnp.max(p2r[:, :Lv, :], axis=1)                 # static slice
    else:
        t = jax.lax.broadcasted_iota(jnp.int32, (Bb, L, O), 1)
        feat = jnp.max(jnp.where(t < Lv, p2r, 0.0), axis=1)    # exact: p2 >= 0

    # ---- fc (Linear E -> E), f32 ----
    out = jnp.dot(feat, wfc_ref[...], preferred_element_type=jnp.float32)
    o_ref[...] = (out + bfc_ref[...]).astype(o_ref.dtype)


def el_similarity_forward(x_ids, y_ids, emb, w1, b1, w2, b2, wfc, bfc,
                          *, block_batch=None, vmem_limit_bytes=None):
    """Full EL_similarity forward. Returns (x_out, y_out), each (B, E)."""
    B, L = x_ids.shape
    V, E = emb.shape
    H = w1.shape[2]
    O = w2.shape[2]
    assert O == E and wfc.shape == (E, E)
    assert L >= 9, "sequence too short for two (conv k=3 + pool k=3) stages"

    # Generation-aware budgets: v7x has 64 MiB VMEM / TensorCore, v5e/v6e have
    # 128 MiB; leave headroom for the double-buffered id blocks.
    try:
        vmem_cap = int(pltpu.get_tpu_info().vmem_capacity_bytes)
    except Exception:  # interpret mode / older jax: assume the small budget
        vmem_cap = 64 << 20
    if vmem_limit_bytes is None:
        vmem_limit_bytes = min(vmem_cap * 7 // 8, 112 << 20)
    if block_batch is None:
        block_batch = 256 if vmem_cap <= (64 << 20) else 512

    # Block/grid selection: at least 2 parallel steps (keeps both v7x TCs
    # busy) and the smallest block covering total/grid (minimal zero padding).
    total = 2 * B
    total8 = _round_up(total, 8)
    grid = max(2, _cdiv(total8, block_batch))
    Bb = _round_up(_cdiv(total8, grid), 8)
    grid = _cdiv(total8, Bb)
    padded = grid * Bb

    ids = jnp.concatenate([x_ids, y_ids], axis=0).astype(jnp.int32)  # (2B, L)
    if padded != total:
        ids = jnp.pad(ids, ((0, padded - total), (0, 0)))
    # Flatten to (padded*L, 1) so the in-kernel one-hot compare broadcasts the
    # id column along lanes (avoids a lane->sublane relayout inside Mosaic).
    ids_flat = ids.reshape(padded * L, 1)

    # Pad the (tiny) embedding table to a 128-row one-hot contraction dim.
    Vp = _round_up(V, 128)
    emb_p = jnp.pad(emb.astype(jnp.bfloat16), ((0, Vp - V), (0, 0)))

    w1m = w1.reshape(3 * E, H).astype(jnp.bfloat16)      # merged-K conv1 RHS
    w2t = w2.astype(jnp.bfloat16)                        # (3, H, O) per tap
    b1_2d = b1.reshape(1, H).astype(jnp.float32)
    b2_2d = b2.reshape(1, O).astype(jnp.float32)
    # TODO(synk): on v5e a bf16 fc weight would save f32-emulated MXU passes;
    # kept f32 here for final-layer accuracy (compute is negligible).
    wfc_f = wfc.astype(jnp.float32)
    bfc_2d = bfc.reshape(1, E).astype(jnp.float32)

    out = pl.pallas_call(
        el_charcnn_fc_kernel,
        out_shape=jax.ShapeDtypeStruct((padded, E), jnp.float32),
        grid_spec=pltpu.PrefetchScalarGridSpec(
            num_scalar_prefetch=0,
            grid=(grid,),
            in_specs=[
                pl.BlockSpec((Bb * L, 1), lambda i: (i, 0)),    # char ids
                pl.BlockSpec((Vp, E), lambda i: (0, 0)),        # emb table
                pl.BlockSpec((3 * E, H), lambda i: (0, 0)),     # W1 merged
                pl.BlockSpec((1, H), lambda i: (0, 0)),         # b1
                pl.BlockSpec((3, H, O), lambda i: (0, 0, 0)),   # W2 per tap
                pl.BlockSpec((1, O), lambda i: (0, 0)),         # b2
                pl.BlockSpec((E, E), lambda i: (0, 0)),         # fc weight
                pl.BlockSpec((1, E), lambda i: (0, 0)),         # fc bias
            ],
            out_specs=pl.BlockSpec((Bb, E), lambda i: (i, 0)),
        ),
        compiler_params=pltpu.CompilerParams(
            dimension_semantics=("parallel",),
            vmem_limit_bytes=int(vmem_limit_bytes)),
    )(ids_flat, emb_p, w1m, b1_2d, w2t, b2_2d, wfc_f, bfc_2d)

    return out[:B], out[B:total]


def el_similarity_reference(x_ids, y_ids, emb, w1, b1, w2, b2, wfc, bfc):
    """Pure-JAX f32 reference matching the PyTorch module semantics."""
    def charcnn_fc(ids):
        h = jnp.take(emb, ids, axis=0)            # (B, L, E) channels-last

        def conv_relu_pool(inp, w, b):
            Lc = inp.shape[1] - 2
            y = sum(jnp.einsum('blc,ch->blh', inp[:, k:k + Lc, :], w[k])
                    for k in range(3)) + b[None, None, :]
            y = jnp.maximum(y, 0.0)
            Lp = Lc - 2
            return jnp.maximum(jnp.maximum(y[:, :Lp], y[:, 1:Lp + 1]),
                               y[:, 2:Lp + 2])

        h = conv_relu_pool(h, w1, b1)
        h = conv_relu_pool(h, w2, b2)
        feat = jnp.max(h, axis=1)                 # (B, E)
        return feat @ wfc + bfc[None, :]

    return charcnn_fc(x_ids), charcnn_fc(y_ids)


if __name__ == "__main__":
    B, L = 8, 16              # batch of char sequences, sequence length
    E, V, H = 32, 97, 128     # embedding_size, char_vocab_size, hidden_filters

    key = jax.random.PRNGKey(0)
    kx, ky, ke, kw1, kb1, kw2, kb2, kwf, kbf = jax.random.split(key, 9)

    x_ids = jax.random.randint(kx, (B, L), 0, V)
    y_ids = jax.random.randint(ky, (B, L), 0, V)
    emb = jax.random.normal(ke, (V, E), jnp.float32)
    w1 = jax.random.normal(kw1, (3, E, H), jnp.float32) * 0.1
    b1 = jax.random.normal(kb1, (H,), jnp.float32) * 0.1
    w2 = jax.random.normal(kw2, (3, H, E), jnp.float32) * 0.1
    b2 = jax.random.normal(kb2, (E,), jnp.float32) * 0.1
    wfc = jax.random.normal(kwf, (E, E), jnp.float32) * 0.1
    bfc = jax.random.normal(kbf, (E,), jnp.float32) * 0.1

    # total=16 rows -> Bb=8, grid=2 parallel steps (both v7x TCs busy).
    x_out, y_out = el_similarity_forward(x_ids, y_ids, emb, w1, b1, w2, b2,
                                         wfc, bfc)
    x_out = jax.block_until_ready(x_out)
    y_out = jax.block_until_ready(y_out)

    x_ref, y_ref = el_similarity_reference(x_ids, y_ids, emb, w1, b1,
                                           w2, b2, wfc, bfc)
    assert x_out.shape == (B, E) and y_out.shape == (B, E)
    # Tolerance loosened because the conv matmuls run in bf16 on the MXU.
    assert jnp.allclose(x_out, x_ref, atol=5e-2, rtol=5e-2), "x mismatch"
    assert jnp.allclose(y_out, y_ref, atol=5e-2, rtol=5e-2), "y mismatch"

    print("KERNEL_OK")
</pallas_src>

<mosaic_0001>
module attributes {stable_mosaic.version = 11 : i64} {
  func.func @el_charcnn_fc_kernel(%arg0: i32, %arg1: memref<128x1xi32, #tpu.memory_space<vmem>>, %arg2: memref<128x32xbf16, #tpu.memory_space<vmem>>, %arg3: memref<96x128xbf16, #tpu.memory_space<vmem>>, %arg4: memref<1x128xf32, #tpu.memory_space<vmem>>, %arg5: memref<3x128x32xbf16, #tpu.memory_space<vmem>>, %arg6: memref<1x32xf32, #tpu.memory_space<vmem>>, %arg7: memref<32x32xf32, #tpu.memory_space<vmem>>, %arg8: memref<1x32xf32, #tpu.memory_space<vmem>>, %arg9: memref<8x32xf32, #tpu.memory_space<vmem>>) attributes {dimension_semantics = [#tpu.dimension_semantics<parallel>], iteration_bounds = array<i64: 2>, scalar_prefetch = 0 : i64, scratch_operands = 0 : i64, tpu.core_type = #tpu.core_type<tc>, window_params = [{transform_indices = @transform_0, window_bounds = array<i64: 128, 1>}, {pipeline_mode = #tpu.pipeline_mode<synchronous>, transform_indices = @transform_1, window_bounds = array<i64: 128, 32>}, {pipeline_mode = #tpu.pipeline_mode<synchronous>, transform_indices = @transform_2, window_bounds = array<i64: 96, 128>}, {pipeline_mode = #tpu.pipeline_mode<synchronous>, transform_indices = @transform_3, window_bounds = array<i64: 1, 128>}, {pipeline_mode = #tpu.pipeline_mode<synchronous>, transform_indices = @transform_4, window_bounds = array<i64: 3, 128, 32>}, {pipeline_mode = #tpu.pipeline_mode<synchronous>, transform_indices = @transform_5, window_bounds = array<i64: 1, 32>}, {pipeline_mode = #tpu.pipeline_mode<synchronous>, transform_indices = @transform_6, window_bounds = array<i64: 32, 32>}, {pipeline_mode = #tpu.pipeline_mode<synchronous>, transform_indices = @transform_7, window_bounds = array<i64: 1, 32>}, {transform_indices = @transform_8, window_bounds = array<i64: 8, 32>}]} {
    %c0 = arith.constant 0 : index
    %c0_0 = arith.constant 0 : index
    %0 = vector.load %arg1[%c0, %c0_0] : memref<128x1xi32, #tpu.memory_space<vmem>>, vector<128x1xi32>
    %1 = tpu.iota {dimensions = array<i32: 1>} : vector<128x128xi32>
    %2 = vector.broadcast %0 : vector<128x1xi32> to vector<128x128xi32>
    %3 = arith.cmpi eq, %1, %2 : vector<128x128xi32>
    %4 = arith.extui %3 : vector<128x128xi1> to vector<128x128xi32>
    %5 = arith.sitofp %4 : vector<128x128xi32> to vector<128x128xf32>
    %6 = arith.truncf %5 : vector<128x128xf32> to vector<128x128xbf16>
    %c0_1 = arith.constant 0 : index
    %c0_2 = arith.constant 0 : index
    %7 = vector.load %arg2[%c0_1, %c0_2] : memref<128x32xbf16, #tpu.memory_space<vmem>>, vector<128x32xbf16>
    %cst = arith.constant dense<0.000000e+00> : vector<128x32xf32>
    %8 = tpu.matmul %6, %7, %cst {dimension_numbers = #tpu.dot_dimension_numbers<[1], [0], [0], [1], [0, 0, 1, 1], [], []>} : vector<128x128xbf16>, vector<128x32xbf16>, vector<128x32xf32> -> vector<128x32xf32>
    %c127_i32 = arith.constant 127 : i32
    %9 = tpu.dynamic_rotate %8 by %c127_i32 dim 0 : vector<128x32xf32>, i32 -> vector<128x32xf32>
    %c126_i32 = arith.constant 126 : i32
    %10 = tpu.dynamic_rotate %8 by %c126_i32 dim 0 : vector<128x32xf32>, i32 -> vector<128x32xf32>
    %11 = tpu.concatenate %8, %9, %10 in 1 : vector<128x32xf32>, vector<128x32xf32>, vector<128x32xf32> -> vector<128x96xf32>
    %12 = arith.truncf %11 : vector<128x96xf32> to vector<128x96xbf16>
    %c0_3 = arith.constant 0 : index
    %c0_4 = arith.constant 0 : index
    %13 = vector.load %arg3[%c0_3, %c0_4] : memref<96x128xbf16, #tpu.memory_space<vmem>>, vector<96x128xbf16>
    %cst_5 = arith.constant dense<0.000000e+00> : vector<128x128xf32>
    %14 = tpu.matmul %12, %13, %cst_5 {dimension_numbers = #tpu.dot_dimension_numbers<[1], [0], [0], [1], [0, 0, 1, 1], [], []>} : vector<128x96xbf16>, vector<96x128xbf16>, vector<128x128xf32> -> vector<128x128xf32>
    %c0_6 = arith.constant 0 : index
    %c0_7 = arith.constant 0 : index
    %15 = vector.load %arg4[%c0_6, %c0_7] : memref<1x128xf32, #tpu.memory_space<vmem>>, vector<1x128xf32>
    %16 = vector.broadcast %15 : vector<1x128xf32> to vector<128x128xf32>
    %17 = arith.addf %14, %16 : vector<128x128xf32>
    %cst_8 = arith.constant 0.000000e+00 : f32
    %18 = vector.broadcast %cst_8 : f32 to vector<128x128xf32>
    %19 = arith.maximumf %17, %18 : vector<128x128xf32>
    %c127_i32_9 = arith.constant 127 : i32
    %20 = tpu.dynamic_rotate %19 by %c127_i32_9 dim 0 : vector<128x128xf32>, i32 -> vector<128x128xf32>
    %21 = arith.maximumf %19, %20 : vector<128x128xf32>
    %c126_i32_10 = arith.constant 126 : i32
    %22 = tpu.dynamic_rotate %19 by %c126_i32_10 dim 0 : vector<128x128xf32>, i32 -> vector<128x128xf32>
    %23 = arith.maximumf %21, %22 : vector<128x128xf32>
    %24 = arith.truncf %23 : vector<128x128xf32> to vector<128x128xbf16>
    %c0_11 = arith.constant 0 : index
    %c0_12 = arith.constant 0 : index
    %c0_13 = arith.constant 0 : index
    %25 = vector.load %arg5[%c0_11, %c0_12, %c0_13] : memref<3x128x32xbf16, #tpu.memory_space<vmem>>, vector<1x128x32xbf16>
    %26 = vector.shape_cast %25 : vector<1x128x32xbf16> to vector<128x32xbf16>
    %cst_14 = arith.constant dense<0.000000e+00> : vector<128x32xf32>
    %27 = tpu.matmul %24, %26, %cst_14 {dimension_numbers = #tpu.dot_dimension_numbers<[1], [0], [0], [1], [0, 0, 1, 1], [], []>} : vector<128x128xbf16>, vector<128x32xbf16>, vector<128x32xf32> -> vector<128x32xf32>
    %c127_i32_15 = arith.constant 127 : i32
    %28 = tpu.dynamic_rotate %23 by %c127_i32_15 dim 0 : vector<128x128xf32>, i32 -> vector<128x128xf32>
    %29 = arith.truncf %28 : vector<128x128xf32> to vector<128x128xbf16>
    %c1 = arith.constant 1 : index
    %c0_16 = arith.constant 0 : index
    %c0_17 = arith.constant 0 : index
    %30 = vector.load %arg5[%c1, %c0_16, %c0_17] : memref<3x128x32xbf16, #tpu.memory_space<vmem>>, vector<1x128x32xbf16>
    %31 = vector.shape_cast %30 : vector<1x128x32xbf16> to vector<128x32xbf16>
    %cst_18 = arith.constant dense<0.000000e+00> : vector<128x32xf32>
    %32 = tpu.matmul %29, %31, %cst_18 {dimension_numbers = #tpu.dot_dimension_numbers<[1], [0], [0], [1], [0, 0, 1, 1], [], []>} : vector<128x128xbf16>, vector<128x32xbf16>, vector<128x32xf32> -> vector<128x32xf32>
    %33 = arith.addf %27, %32 : vector<128x32xf32>
    %c126_i32_19 = arith.constant 126 : i32
    %34 = tpu.dynamic_rotate %23 by %c126_i32_19 dim 0 : vector<128x128xf32>, i32 -> vector<128x128xf32>
    %35 = arith.truncf %34 : vector<128x128xf32> to vector<128x128xbf16>
    %c2 = arith.constant 2 : index
    %c0_20 = arith.constant 0 : index
    %c0_21 = arith.constant 0 : index
    %36 = vector.load %arg5[%c2, %c0_20, %c0_21] : memref<3x128x32xbf16, #tpu.memory_space<vmem>>, vector<1x128x32xbf16>
    %37 = vector.shape_cast %36 : vector<1x128x32xbf16> to vector<128x32xbf16>
    %cst_22 = arith.constant dense<0.000000e+00> : vector<128x32xf32>
    %38 = tpu.matmul %35, %37, %cst_22 {dimension_numbers = #tpu.dot_dimension_numbers<[1], [0], [0], [1], [0, 0, 1, 1], [], []>} : vector<128x128xbf16>, vector<128x32xbf16>, vector<128x32xf32> -> vector<128x32xf32>
    %39 = arith.addf %33, %38 : vector<128x32xf32>
    %c0_23 = arith.constant 0 : index
    %c0_24 = arith.constant 0 : index
    %40 = vector.load %arg6[%c0_23, %c0_24] : memref<1x32xf32, #tpu.memory_space<vmem>>, vector<1x32xf32>
    %41 = vector.broadcast %40 : vector<1x32xf32> to vector<128x32xf32>
    %42 = arith.addf %39, %41 : vector<128x32xf32>
    %cst_25 = arith.constant 0.000000e+00 : f32
    %43 = vector.broadcast %cst_25 : f32 to vector<128x32xf32>
    %44 = arith.maximumf %42, %43 : vector<128x32xf32>
    %c127_i32_26 = arith.constant 127 : i32
    %45 = tpu.dynamic_rotate %44 by %c127_i32_26 dim 0 : vector<128x32xf32>, i32 -> vector<128x32xf32>
    %46 = arith.maximumf %44, %45 : vector<128x32xf32>
    %c126_i32_27 = arith.constant 126 : i32
    %47 = tpu.dynamic_rotate %44 by %c126_i32_27 dim 0 : vector<128x32xf32>, i32 -> vector<128x32xf32>
    %48 = arith.maximumf %46, %47 : vector<128x32xf32>
    %49 = vector.shape_cast %48 : vector<128x32xf32> to vector<8x16x32xf32>
    %50 = vector.extract_strided_slice %49 {offsets = [0, 0, 0], sizes = [8, 8, 32], strides = [1, 1, 1]} : vector<8x16x32xf32> to vector<8x8x32xf32>
    %cst_28 = arith.constant dense<0xFF800000> : vector<8x32xf32>
    %51 = vector.multi_reduction <maximumf>, %50, %cst_28 [1] : vector<8x8x32xf32> to vector<8x32xf32>
    %c0_29 = arith.constant 0 : index
    %c0_30 = arith.constant 0 : index
    %52 = vector.load %arg7[%c0_29, %c0_30] : memref<32x32xf32, #tpu.memory_space<vmem>>, vector<32x32xf32>
    %cst_31 = arith.constant dense<0.000000e+00> : vector<8x32xf32>
    %53 = tpu.matmul %51, %52, %cst_31 {dimension_numbers = #tpu.dot_dimension_numbers<[1], [0], [0], [1], [0, 0, 1, 1], [], []>} : vector<8x32xf32>, vector<32x32xf32>, vector<8x32xf32> -> vector<8x32xf32>
    %c0_32 = arith.constant 0 : index
    %c0_33 = arith.constant 0 : index
    %54 = vector.load %arg8[%c0_32, %c0_33] : memref<1x32xf32, #tpu.memory_space<vmem>>, vector<1x32xf32>
    %55 = vector.broadcast %54 : vector<1x32xf32> to vector<8x32xf32>
    %56 = arith.addf %53, %55 : vector<8x32xf32>
    %c0_34 = arith.constant 0 : index
    %c0_35 = arith.constant 0 : index
    %57 = vector.load %arg9[%c0_34, %c0_35] : memref<8x32xf32, #tpu.memory_space<vmem>>, vector<8x32xf32>
    tpu.vector_store %arg9[%c0_34, %c0_35], %56 {strides = array<i32>} : memref<8x32xf32, #tpu.memory_space<vmem>>, vector<8x32xf32>,
    return
  }
  func.func @transform_0(%arg0: i32) -> (i32, i32) {
    %c0_i32 = arith.constant 0 : i32
    %c0_i32_0 = arith.constant 0 : i32
    return %arg0, %c0_i32 : i32, i32
  }
  func.func @transform_1(%arg0: i32) -> (i32, i32) {
    %c0_i32 = arith.constant 0 : i32
    %c0_i32_0 = arith.constant 0 : i32
    %c0_i32_1 = arith.constant 0 : i32
    return %c0_i32, %c0_i32_0 : i32, i32
  }
  func.func @transform_2(%arg0: i32) -> (i32, i32) {
    %c0_i32 = arith.constant 0 : i32
    %c0_i32_0 = arith.constant 0 : i32
    %c0_i32_1 = arith.constant 0 : i32
    return %c0_i32, %c0_i32_0 : i32, i32
  }
  func.func @transform_3(%arg0: i32) -> (i32, i32) {
    %c0_i32 = arith.constant 0 : i32
    %c0_i32_0 = arith.constant 0 : i32
    %c0_i32_1 = arith.constant 0 : i32
    return %c0_i32, %c0_i32_0 : i32, i32
  }
  func.func @transform_4(%arg0: i32) -> (i32, i32, i32) {
    %c0_i32 = arith.constant 0 : i32
    %c0_i32_0 = arith.constant 0 : i32
    %c0_i32_1 = arith.constant 0 : i32
    %c0_i32_2 = arith.constant 0 : i32
    return %c0_i32, %c0_i32_0, %c0_i32_1 : i32, i32, i32
  }
  func.func @transform_5(%arg0: i32) -> (i32, i32) {
    %c0_i32 = arith.constant 0 : i32
    %c0_i32_0 = arith.constant 0 : i32
    %c0_i32_1 = arith.constant 0 : i32
    return %c0_i32, %c0_i32_0 : i32, i32
  }
  func.func @transform_6(%arg0: i32) -> (i32, i32) {
    %c0_i32 = arith.constant 0 : i32
    %c0_i32_0 = arith.constant 0 : i32
    %c0_i32_1 = arith.constant 0 : i32
    return %c0_i32, %c0_i32_0 : i32, i32
  }
  func.func @transform_7(%arg0: i32) -> (i32, i32) {
    %c0_i32 = arith.constant 0 : i32
    %c0_i32_0 = arith.constant 0 : i32
    %c0_i32_1 = arith.constant 0 : i32
    return %c0_i32, %c0_i32_0 : i32, i32
  }
  func.func @transform_8(%arg0: i32) -> (i32, i32) {
    %c0_i32 = arith.constant 0 : i32
    %c0_i32_0 = arith.constant 0 : i32
    return %arg0, %c0_i32 : i32, i32
  }
}

</mosaic_0001>

<llo_original>
// kernel: tpu_custom_call.1
$region0: #{tpu_custom_call.1}
  #allocation0 [shape = 'u32[]', space=smem, size = 0x4, offset = 0x4, fixed_abs, tag = 'smem constant byte address 0x4 - core index']
  #allocation1 [shape = 'u32[144,128]{1,0:T(1,128)}', space=vmem, size = 0x12000, scoped, tag = 'internal scratch']
  %s0 = inlined_call_operand.vmem [shape: s32[256,1], index: 0, kind: input, shape index: {}]
  %s1 = inlined_call_operand.vmem [shape: bf16[128,32], index: 1, kind: input, shape index: {}]
  %s2 = inlined_call_operand.vmem [shape: bf16[96,128], index: 2, kind: input, shape index: {}]
  %s3 = inlined_call_operand.vmem [shape: f32[1,128], index: 3, kind: input, shape index: {}]
  %s4 = inlined_call_operand.vmem [shape: bf16[3,128,32], index: 4, kind: input, shape index: {}]
  %s5 = inlined_call_operand.vmem [shape: f32[1,32], index: 5, kind: input, shape index: {}]
  %s6 = inlined_call_operand.vmem [shape: f32[32,32], index: 6, kind: input, shape index: {}]
  %s7 = inlined_call_operand.vmem [shape: f32[1,32], index: 7, kind: input, shape index: {}]
  %s8 = inlined_call_operand.hbm [shape: f32[16,32], index: 8, kind: output, shape index: {}]
  %s9 = sld [smem:[#allocation0]]
  $region65: #{tpu_custom_call.1} parent=0
    _
  %s11 = ssub.s32 1, %s9
  %s12 = scalar_select 0, %s11, %s9
  $region1: #{tpu_custom_call.1} parent=0
    #allocation2 [shape = 'u8[8192]{0}', space=vmem, size = 0x2000, scoped, tag = 'output window, operand 0']
    #allocation3 [shape = 's32[2]{0}', space=sflag, size = 0x8, scoped, tag = 'scoped memory for tpu_custom_call.1']
    %13 = vsyncpa [#allocation3], 0
    %s14 = scalar_lea.sflag [#allocation3], 1
    %15 = vsyncpa %s14, 0
    loop: start=0, step=1, limit=4
    $region2: #{tpu_custom_call.1} parent=1 // loop_pre_header
      _
    $region3: #{tpu_custom_call.1} parent=1 // loop_header
      %s17 = sphi 0, %s21
      %p18 = scmp.ge.s32.totalorder %s17, 4
      %s27 = sphi 0, %s29
      %s30 = sphi 0, %s27
      %s31 = sphi 0, %s30
      %s47 = sphi 0, %s31
      %s51 = sphi 0, %s51
      %s53 = sphi 0, %s51
      %s54 = sphi 0, %s53
      %s68 = sphi 0, %s54
      %s72 = sphi 0, %s72
      %s74 = sphi 0, %s72
      %s75 = sphi 0, %s74
      %s89 = sphi 0, %s75
      %s93 = sphi 0, %s93
      %s95 = sphi 0, %s93
      %s96 = sphi 0, %s95
      %s110 = sphi 0, %s96
      %s114 = sphi 0, %s114
      %s116 = sphi 0, %s114
      %s117 = sphi 0, %s116
      %s131 = sphi 0, %s117
      %s135 = sphi 0, %s135
      %s137 = sphi 0, %s135
      %s138 = sphi 0, %s137
      %s152 = sphi 0, %s138
      %s156 = sphi 0, %s156
      %s158 = sphi 0, %s156
      %s159 = sphi 0, %s158
      %s173 = sphi 0, %s159
      %s177 = sphi 0, %s177
      %s179 = sphi 0, %s177
      %s180 = sphi 0, %s179
      %s194 = sphi 0, %s180
      %s200 = sphi 0, %s202
      %s203 = sphi 0, %s200
      %s204 = sphi 0, %s203
      %s220 = sphi 0, %s204
    $region4: #{tpu_custom_call.1} parent=1 // loop_header_branch
      %20 = sbr.rel (%p18) target = $region8
    $region5: #{tpu_custom_call.1} parent=1 // loop_body
      %s22 = ssub.s32 %s17, 1
      %s23 = ssub.s32 %s17, 2
      %s24 = sadd.s32 %s17, 1
      %s25 = ssub.s32 %s17, %s24
      %p26 = scmp.eq.s32.totalorder %s25, 0
      %s28 = sadd.s32 %s27, 1
      %s29 = scalar_select %p26, %s27, %s28
      %p32 = pneg %p26
      %p33 = scmp.eq.s32.totalorder %s17, 1
      %p34 = por %p32, %p33
      %p35 = scmp.ne.s32.totalorder %s27, %s30
      %p36 = scmp.eq.s32.totalorder %s17, 0
      %p37 = por %p35, %p36
      %p38 = scmp.ne.s32.totalorder %s27, %s30
      %p39 = scmp.eq.s32.totalorder %s22, 1
      %p40 = por %p38, %p39
      %p41 = scmp.ne.s32.totalorder %s30, %s31
      %p42 = scmp.eq.s32.totalorder %s22, 0
      %p43 = por %p41, %p42
      %p44 = scmp.ne.s32.totalorder %s30, %s31
      %p45 = scmp.eq.s32.totalorder %s23, 1
      %p46 = por %p44, %p45
      %p48 = scmp.ne.s32.totalorder %s31, %s47
      %p49 = scmp.eq.s32.totalorder %s23, 0
      %p50 = por %p48, %p49
      %s52 = sadd.s32 %s51, 1
      %p55 = scmp.eq.s32.totalorder %s17, 1
      %p56 = scmp.ne.s32.totalorder %s51, %s53
      %p57 = scmp.eq.s32.totalorder %s17, 0
      %p58 = por %p56, %p57
      %p59 = scmp.ne.s32.totalorder %s51, %s53
      %p60 = scmp.eq.s32.totalorder %s22, 1
      %p61 = por %p59, %p60
      %p62 = scmp.ne.s32.totalorder %s53, %s54
      %p63 = scmp.eq.s32.totalorder %s22, 0
      %p64 = por %p62, %p63
      %p65 = scmp.ne.s32.totalorder %s53, %s54
      %p66 = scmp.eq.s32.totalorder %s23, 1
      %p67 = por %p65, %p66
      %p69 = scmp.ne.s32.totalorder %s54, %s68
      %p70 = scmp.eq.s32.totalorder %s23, 0
      %p71 = por %p69, %p70
      %s73 = sadd.s32 %s72, 1
      %p76 = scmp.eq.s32.totalorder %s17, 1
      %p77 = scmp.ne.s32.totalorder %s72, %s74
      %p78 = scmp.eq.s32.totalorder %s17, 0
      %p79 = por %p77, %p78
      %p80 = scmp.ne.s32.totalorder %s72, %s74
      %p81 = scmp.eq.s32.totalorder %s22, 1
      %p82 = por %p80, %p81
      %p83 = scmp.ne.s32.totalorder %s74, %s75
      %p84 = scmp.eq.s32.totalorder %s22, 0
      %p85 = por %p83, %p84
      %p86 = scmp.ne.s32.totalorder %s74, %s75
      %p87 = scmp.eq.s32.totalorder %s23, 1
      %p88 = por %p86, %p87
      %p90 = scmp.ne.s32.totalorder %s75, %s89
      %p91 = scmp.eq.s32.totalorder %s23, 0
      %p92 = por %p90, %p91
      %s94 = sadd.s32 %s93, 1
      %p97 = scmp.eq.s32.totalorder %s17, 1
      %p98 = scmp.ne.s32.totalorder %s93, %s95
      %p99 = scmp.eq.s32.totalorder %s17, 0
      %p100 = por %p98, %p99
      %p101 = scmp.ne.s32.totalorder %s93, %s95
      %p102 = scmp.eq.s32.totalorder %s22, 1
      %p103 = por %p101, %p102
      %p104 = scmp.ne.s32.totalorder %s95, %s96
      %p105 = scmp.eq.s32.totalorder %s22, 0
      %p106 = por %p104, %p105
      %p107 = scmp.ne.s32.totalorder %s95, %s96
      %p108 = scmp.eq.s32.totalorder %s23, 1
      %p109 = por %p107, %p108
      %p111 = scmp.ne.s32.totalorder %s96, %s110
      %p112 = scmp.eq.s32.totalorder %s23, 0
      %p113 = por %p111, %p112
      %s115 = sadd.s32 %s114, 1
      %p118 = scmp.eq.s32.totalorder %s17, 1
      %p119 = scmp.ne.s32.totalorder %s114, %s116
      %p120 = scmp.eq.s32.totalorder %s17, 0
      %p121 = por %p119, %p120
      %p122 = scmp.ne.s32.totalorder %s114, %s116
      %p123 = scmp.eq.s32.totalorder %s22, 1
      %p124 = por %p122, %p123
      %p125 = scmp.ne.s32.totalorder %s116, %s117
      %p126 = scmp.eq.s32.totalorder %s22, 0
      %p127 = por %p125, %p126
      %p128 = scmp.ne.s32.totalorder %s116, %s117
      %p129 = scmp.eq.s32.totalorder %s23, 1
      %p130 = por %p128, %p129
      %p132 = scmp.ne.s32.totalorder %s117, %s131
      %p133 = scmp.eq.s32.totalorder %s23, 0
      %p134 = por %p132, %p133
      %s136 = sadd.s32 %s135, 1
      %p139 = scmp.eq.s32.totalorder %s17, 1
      %p140 = scmp.ne.s32.totalorder %s135, %s137
      %p141 = scmp.eq.s32.totalorder %s17, 0
      %p142 = por %p140, %p141
      %p143 = scmp.ne.s32.totalorder %s135, %s137
      %p144 = scmp.eq.s32.totalorder %s22, 1
      %p145 = por %p143, %p144
      %p146 = scmp.ne.s32.totalorder %s137, %s138
      %p147 = scmp.eq.s32.totalorder %s22, 0
      %p148 = por %p146, %p147
      %p149 = scmp.ne.s32.totalorder %s137, %s138
      %p150 = scmp.eq.s32.totalorder %s23, 1
      %p151 = por %p149, %p150
      %p153 = scmp.ne.s32.totalorder %s138, %s152
      %p154 = scmp.eq.s32.totalorder %s23, 0
      %p155 = por %p153, %p154
      %s157 = sadd.s32 %s156, 1
      %p160 = scmp.eq.s32.totalorder %s17, 1
      %p161 = scmp.ne.s32.totalorder %s156, %s158
      %p162 = scmp.eq.s32.totalorder %s17, 0
      %p163 = por %p161, %p162
      %p164 = scmp.ne.s32.totalorder %s156, %s158
      %p165 = scmp.eq.s32.totalorder %s22, 1
      %p166 = por %p164, %p165
      %p167 = scmp.ne.s32.totalorder %s158, %s159
      %p168 = scmp.eq.s32.totalorder %s22, 0
      %p169 = por %p167, %p168
      %p170 = scmp.ne.s32.totalorder %s158, %s159
      %p171 = scmp.eq.s32.totalorder %s23, 1
      %p172 = por %p170, %p171
      %p174 = scmp.ne.s32.totalorder %s159, %s173
      %p175 = scmp.eq.s32.totalorder %s23, 0
      %p176 = por %p174, %p175
      %s178 = sadd.s32 %s177, 1
      %p181 = scmp.eq.s32.totalorder %s17, 1
      %p182 = scmp.ne.s32.totalorder %s177, %s179
      %p183 = scmp.eq.s32.totalorder %s17, 0
      %p184 = por %p182, %p183
      %p185 = scmp.ne.s32.totalorder %s177, %s179
      %p186 = scmp.eq.s32.totalorder %s22, 1
      %p187 = por %p185, %p186
      %p188 = scmp.ne.s32.totalorder %s179, %s180
      %p189 = scmp.eq.s32.totalorder %s22, 0
      %p190 = por %p188, %p189
      %p191 = scmp.ne.s32.totalorder %s179, %s180
      %p192 = scmp.eq.s32.totalorder %s23, 1
      %p193 = por %p191, %p192
      %p195 = scmp.ne.s32.totalorder %s180, %s194
      %p196 = scmp.eq.s32.totalorder %s23, 0
      %p197 = por %p195, %p196
      %s198 = ssub.s32 %s17, %s24
      %p199 = scmp.eq.s32.totalorder %s198, 0
      %s201 = sadd.s32 %s200, 1
      %s202 = scalar_select %p199, %s200, %s201
      %p205 = pneg %p199
      %p206 = scmp.eq.s32.totalorder %s17, 1
      %p207 = por %p205, %p206
      %p208 = scmp.ne.s32.totalorder %s200, %s203
      %p209 = scmp.eq.s32.totalorder %s17, 0
      %p210 = por %p208, %p209
      %p211 = scmp.ne.s32.totalorder %s200, %s203
      %p212 = scmp.eq.s32.totalorder %s22, 1
      %p213 = por %p211, %p212
      %p214 = scmp.ne.s32.totalorder %s203, %s204
      %p215 = scmp.eq.s32.totalorder %s22, 0
      %p216 = por %p214, %p215
      %p217 = scmp.ne.s32.totalorder %s203, %s204
      %p218 = scmp.eq.s32.totalorder %s23, 1
      %p219 = por %p217, %p218
      %p221 = scmp.ne.s32.totalorder %s204, %s220
      %p222 = scmp.eq.s32.totalorder %s23, 0
      %p223 = por %p221, %p222
      %p224 = scmp.le.s32.totalorder 1, %s17
      %p225 = scmp.lt.s32.totalorder %s17, 3
      %p226 = pnand %p224, %p225
      %p227 = pneg %p226
      // Predicated region
      $region9: #{tpu_custom_call.1} parent=5 // pred_check
        _
      $region10: #{tpu_custom_call.1} parent=5 // pred_check_branch
        %229 = sbr.rel (%p226) target = $region12
      $region11: #{tpu_custom_call.1} parent=5 // pred_region
        %s230 = ssub.s32 %s17, 1
        // Predicated region
        $region13: #{tpu_custom_call.1} parent=11 // pred_check
          %p231 = pneg %p64
        $region14: #{tpu_custom_call.1} parent=11 // pred_check_branch
          %233 = sbr.rel (%p231) target = $region16
        $region15: #{tpu_custom_call.1} parent=11 // pred_region
          _
        $region16: #{tpu_custom_call.1} parent=11 // pred_fallthru
          _
        // Predicated region
        $region17: #{tpu_custom_call.1} parent=11 // pred_check
          %p234 = pneg %p85
        $region18: #{tpu_custom_call.1} parent=11 // pred_check_branch
          %236 = sbr.rel (%p234) target = $region20
        $region19: #{tpu_custom_call.1} parent=11 // pred_region
          _
        $region20: #{tpu_custom_call.1} parent=11 // pred_fallthru
          _
        // Predicated region
        $region21: #{tpu_custom_call.1} parent=11 // pred_check
          %p237 = pneg %p106
        $region22: #{tpu_custom_call.1} parent=11 // pred_check_branch
          %239 = sbr.rel (%p237) target = $region24
        $region23: #{tpu_custom_call.1} parent=11 // pred_region
          _
        $region24: #{tpu_custom_call.1} parent=11 // pred_fallthru
          _
        // Predicated region
        $region25: #{tpu_custom_call.1} parent=11 // pred_check
          %p240 = pneg %p127
        $region26: #{tpu_custom_call.1} parent=11 // pred_check_branch
          %242 = sbr.rel (%p240) target = $region28
        $region27: #{tpu_custom_call.1} parent=11 // pred_region
          _
        $region28: #{tpu_custom_call.1} parent=11 // pred_fallthru
          _
        // Predicated region
        $region29: #{tpu_custom_call.1} parent=11 // pred_check
          %p243 = pneg %p148
        $region30: #{tpu_custom_call.1} parent=11 // pred_check_branch
          %245 = sbr.rel (%p243) target = $region32
        $region31: #{tpu_custom_call.1} parent=11 // pred_region
          _
        $region32: #{tpu_custom_call.1} parent=11 // pred_fallthru
          _
        // Predicated region
        $region33: #{tpu_custom_call.1} parent=11 // pred_check
          %p246 = pneg %p169
        $region34: #{tpu_custom_call.1} parent=11 // pred_check_branch
          %248 = sbr.rel (%p246) target = $region36
        $region35: #{tpu_custom_call.1} parent=11 // pred_region
          _
        $region36: #{tpu_custom_call.1} parent=11 // pred_fallthru
          _
        // Predicated region
        $region37: #{tpu_custom_call.1} parent=11 // pred_check
          %p249 = pneg %p190
        $region38: #{tpu_custom_call.1} parent=11 // pred_check_branch
          %251 = sbr.rel (%p249) target = $region40
        $region39: #{tpu_custom_call.1} parent=11 // pred_region
          _
        $region40: #{tpu_custom_call.1} parent=11 // pred_fallthru
          _
      $region12: #{tpu_custom_call.1} parent=5 // pred_fallthru
        _
      %p252 = scmp.lt.s32.totalorder %s17, 2
      // Predicated region
      $region41: #{tpu_custom_call.1} parent=5 // pred_check
        %p253 = pneg %p252
      $region42: #{tpu_custom_call.1} parent=5 // pred_check_branch
        %255 = sbr.rel (%p253) target = $region44
      $region43: #{tpu_custom_call.1} parent=5 // pred_region
        // Predicated region
        $region45: #{tpu_custom_call.1} parent=43 // pred_check
          %p256 = pneg %p37
        $region46: #{tpu_custom_call.1} parent=43 // pred_check_branch
          %258 = sbr.rel (%p256) target = $region48
        $region47: #{tpu_custom_call.1} parent=43 // pred_region
          %s259 = smul.u32 16, %s17
          %p260 = scmp.lt.s32.totalorder %s259, 31
          %s261 = scalar_select %p260, %s259, 31
          %s262 = smul.addr %s261, 8
          %s263 = scalar_lea.vmem %s0, %s262
          %s264 = smul.u32 16, %s17
        $region48: #{tpu_custom_call.1} parent=43 // pred_fallthru
          _
      $region44: #{tpu_custom_call.1} parent=5 // pred_fallthru
        _
      %p265 = scmp.le.s32.totalorder 1, %s17
      %p266 = scmp.lt.s32.totalorder %s17, 3
      %p267 = pnand %p265, %p266
      %p268 = pneg %p267
      // Predicated region
      $region49: #{tpu_custom_call.1} parent=5 // pred_check
        _
      $region50: #{tpu_custom_call.1} parent=5 // pred_check_branch
        %270 = sbr.rel (%p267) target = $region52
      $region51: #{tpu_custom_call.1} parent=5 // pred_region
        %s271 = ssub.s32 %s17, 1
        %s272 = smul.u32 16, %s22
        %p273 = scmp.lt.s32.totalorder %s272, 31
        %s274 = scalar_select %p273, %s272, 31
        %s275 = smul.addr %s274, 8
        %s276 = scalar_lea.vmem %s0, %s275
        %p277 = pneg %p43
        %p278 = pneg %p40
        %p279 = pneg %p64
        %p280 = pneg %p61
        %p281 = pneg %p85
        %p282 = pneg %p82
        %p283 = pneg %p106
        %p284 = pneg %p103
        %p285 = pneg %p127
        %p286 = pneg %p124
        %p287 = pneg %p148
        %p288 = pneg %p145
        %p289 = pneg %p169
        %p290 = pneg %p166
        %p291 = pneg %p190
        %p292 = pneg %p187
        %p293 = pneg %p216
        %p294 = pneg %p213
        %s295 = sand.u32 %s203, 1
        %s296 = scalar_lea.sflag [#allocation3], %s295
        %s297 = sand.u32 %s203, 1
        %s298 = smul.addr %s297, 8
        %s299 = scalar_lea.vmem [#allocation2], %s298
        %s300 = smul.u32 16, %s22
        %p301 = scmp.lt.s32.totalorder %s300, 31
        %s302 = scalar_select %p301, %s300, 31
        %s303 = smul.addr %s302, 8
        %s304 = scalar_lea.vmem %s0, %s303
        %s305 = smul.u32 16, %s22
        %v307 = vld [vmem:[%s304] sm:$0xff]
        %v308 = vld [vmem:[%s304 + $0x8] sm:$0xff]
        %v309 = vld [vmem:[%s304 + $0x10] sm:$0xff]
        %v310 = vld [vmem:[%s304 + $0x18] sm:$0xff]
        %v311 = vld [vmem:[%s304 + $0x20] sm:$0xff]
        %v312 = vld [vmem:[%s304 + $0x28] sm:$0xff]
        %v313 = vld [vmem:[%s304 + $0x30] sm:$0xff]
        %v314 = vld [vmem:[%s304 + $0x38] sm:$0xff]
        %v315 = vld [vmem:[%s304 + $0x40] sm:$0xff]
        %v316 = vld [vmem:[%s304 + $0x48] sm:$0xff]
        %v317 = vld [vmem:[%s304 + $0x50] sm:$0xff]
        %v318 = vld [vmem:[%s304 + $0x58] sm:$0xff]
        %v319 = vld [vmem:[%s304 + $0x60] sm:$0xff]
        %v320 = vld [vmem:[%s304 + $0x68] sm:$0xff]
        %v321 = vld [vmem:[%s304 + $0x70] sm:$0xff]
        %v322 = vld [vmem:[%s304 + $0x78] sm:$0xff]
        %v323 = vlaneseq
        %v324 = vand.u32 %v323, 127
        %325 = vset.pattern.permute.xlu0 0
        %326 = vperm.xlu0 %325, %v307
        %v327 = vpop.permute.xlu0 %326
        %328 = vset.pattern.permute.xlu0 0
        %329 = vperm.xlu0 %328, %v308
        %v330 = vpop.permute.xlu0 %329
        %331 = vset.pattern.permute.xlu0 0
        %332 = vperm.xlu0 %331, %v309
        %v333 = vpop.permute.xlu0 %332
        %334 = vset.pattern.permute.xlu0 0
        %335 = vperm.xlu0 %334, %v310
        %v336 = vpop.permute.xlu0 %335
        %337 = vset.pattern.permute.xlu0 0
        %338 = vperm.xlu0 %337, %v311
        %v339 = vpop.permute.xlu0 %338
        %340 = vset.pattern.permute.xlu0 0
        %341 = vperm.xlu0 %340, %v312
        %v342 = vpop.permute.xlu0 %341
        %343 = vset.pattern.permute.xlu0 0
        %344 = vperm.xlu0 %343, %v313
        %v345 = vpop.permute.xlu0 %344
        %346 = vset.pattern.permute.xlu0 0
        %347 = vperm.xlu0 %346, %v314
        %v348 = vpop.permute.xlu0 %347
        %349 = vset.pattern.permute.xlu0 0
        %350 = vperm.xlu0 %349, %v315
        %v351 = vpop.permute.xlu0 %350
        %352 = vset.pattern.permute.xlu0 0
        %353 = vperm.xlu0 %352, %v316
        %v354 = vpop.permute.xlu0 %353
        %355 = vset.pattern.permute.xlu0 0
        %356 = vperm.xlu0 %355, %v317
        %v357 = vpop.permute.xlu0 %356
        %358 = vset.pattern.permute.xlu0 0
        %359 = vperm.xlu0 %358, %v318
        %v360 = vpop.permute.xlu0 %359
        %361 = vset.pattern.permute.xlu0 0
        %362 = vperm.xlu0 %361, %v319
        %v363 = vpop.permute.xlu0 %362
        %364 = vset.pattern.permute.xlu0 0
        %365 = vperm.xlu0 %364, %v320
        %v366 = vpop.permute.xlu0 %365
        %367 = vset.pattern.permute.xlu0 0
        %368 = vperm.xlu0 %367, %v321
        %v369 = vpop.permute.xlu0 %368
        %370 = vset.pattern.permute.xlu0 0
        %371 = vperm.xlu0 %370, %v322
        %v372 = vpop.permute.xlu0 %371
        %vm373 = vcmp.eq.s32.totalorder %v324, %v327
        %vm374 = vcmp.eq.s32.totalorder %v324, %v330
        %vm375 = vcmp.eq.s32.totalorder %v324, %v333
        %vm376 = vcmp.eq.s32.totalorder %v324, %v336
        %vm377 = vcmp.eq.s32.totalorder %v324, %v339
        %vm378 = vcmp.eq.s32.totalorder %v324, %v342
        %vm379 = vcmp.eq.s32.totalorder %v324, %v345
        %vm380 = vcmp.eq.s32.totalorder %v324, %v348
        %vm381 = vcmp.eq.s32.totalorder %v324, %v351
        %vm382 = vcmp.eq.s32.totalorder %v324, %v354
        %vm383 = vcmp.eq.s32.totalorder %v324, %v357
        %vm384 = vcmp.eq.s32.totalorder %v324, %v360
        %vm385 = vcmp.eq.s32.totalorder %v324, %v363
        %vm386 = vcmp.eq.s32.totalorder %v324, %v366
        %vm387 = vcmp.eq.s32.totalorder %v324, %v369
        %vm388 = vcmp.eq.s32.totalorder %v324, %v372
        %v389 = vsel %vm373, 1, 0
        %v390 = vsel %vm374, 1, 0
        %v391 = vsel %vm375, 1, 0
        %v392 = vsel %vm376, 1, 0
        %v393 = vsel %vm377, 1, 0
        %v394 = vsel %vm378, 1, 0
        %v395 = vsel %vm379, 1, 0
        %v396 = vsel %vm380, 1, 0
        %v397 = vsel %vm381, 1, 0
        %v398 = vsel %vm382, 1, 0
        %v399 = vsel %vm383, 1, 0
        %v400 = vsel %vm384, 1, 0
        %v401 = vsel %vm385, 1, 0
        %v402 = vsel %vm386, 1, 0
        %v403 = vsel %vm387, 1, 0
        %v404 = vsel %vm388, 1, 0
        %v405 = vcvt.s32.f32 %v389
        %v406 = vcvt.s32.f32 %v390
        %v407 = vcvt.s32.f32 %v391
        %v408 = vcvt.s32.f32 %v392
        %v409 = vcvt.s32.f32 %v393
        %v410 = vcvt.s32.f32 %v394
        %v411 = vcvt.s32.f32 %v395
        %v412 = vcvt.s32.f32 %v396
        %v413 = vcvt.s32.f32 %v397
        %v414 = vcvt.s32.f32 %v398
        %v415 = vcvt.s32.f32 %v399
        %v416 = vcvt.s32.f32 %v400
        %v417 = vcvt.s32.f32 %v401
        %v418 = vcvt.s32.f32 %v402
        %v419 = vcvt.s32.f32 %v403
        %v420 = vcvt.s32.f32 %v404
        %v421 = vpack.c.bf16 %v406, %v405
        %v422 = vpack.c.bf16 %v408, %v407
        %v423 = vpack.c.bf16 %v410, %v409
        %v424 = vpack.c.bf16 %v412, %v411
        %v425 = vpack.c.bf16 %v414, %v413
        %v426 = vpack.c.bf16 %v416, %v415
        %v427 = vpack.c.bf16 %v418, %v417
        %v428 = vpack.c.bf16 %v420, %v419
        %v429 = vld [vmem:[%s1] sm:$0xf]
        %v430 = vld [vmem:[%s1 + $0x4] sm:$0xf]
        %v431 = vld [vmem:[%s1 + $0x8] sm:$0xf]
        %v432 = vld [vmem:[%s1 + $0xc] sm:$0xf]
        %v433 = vld [vmem:[%s1 + $0x10] sm:$0xf]
        %v434 = vld [vmem:[%s1 + $0x14] sm:$0xf]
        %v435 = vld [vmem:[%s1 + $0x18] sm:$0xf]
        %v436 = vld [vmem:[%s1 + $0x1c] sm:$0xf]
        %v437 = vld [vmem:[%s1 + $0x20] sm:$0xf]
        %v438 = vld [vmem:[%s1 + $0x24] sm:$0xf]
        %v439 = vld [vmem:[%s1 + $0x28] sm:$0xf]
        %v440 = vld [vmem:[%s1 + $0x2c] sm:$0xf]
        %v441 = vld [vmem:[%s1 + $0x30] sm:$0xf]
        %v442 = vld [vmem:[%s1 + $0x34] sm:$0xf]
        %v443 = vld [vmem:[%s1 + $0x38] sm:$0xf]
        %v444 = vld [vmem:[%s1 + $0x3c] sm:$0xf]
        %v461 = vunpack.c.l.b16 %v429
        %v462 = vunpack.c.l.b16 %v430
        %v463 = vunpack.c.l.b16 %v431
        %v464 = vunpack.c.l.b16 %v432
        %v465 = vunpack.c.l.b16 %v433
        %v466 = vunpack.c.l.b16 %v434
        %v467 = vunpack.c.l.b16 %v435
        %v468 = vunpack.c.l.b16 %v436
        %v469 = vunpack.c.l.b16 %v437
        %v470 = vunpack.c.l.b16 %v438
        %v471 = vunpack.c.l.b16 %v439
        %v472 = vunpack.c.l.b16 %v440
        %v473 = vunpack.c.l.b16 %v441
        %v474 = vunpack.c.l.b16 %v442
        %v475 = vunpack.c.l.b16 %v443
        %v476 = vunpack.c.l.b16 %v444
        %v477 = vpack.c.b16 %v462, %v461
        %v478 = vpack.c.b16 %v464, %v463
        %v479 = vpack.c.b16 %v466, %v465
        %v480 = vpack.c.b16 %v468, %v467
        %v481 = vpack.c.b16 %v470, %v469
        %v482 = vpack.c.b16 %v472, %v471
        %v483 = vpack.c.b16 %v474, %v473
        %v484 = vpack.c.b16 %v476, %v475
        %493 = vmatprep.subr.bf16.mxu0 0
        %494 = vmatpush1.bf16.msra.mxu0 %v484
        %495 = vmatprep.subr.bf16.mxu0 0
        %496 = vmatpush1.bf16.msra.mxu0 %v483
        %497 = vmatprep.subr.bf16.mxu0 0
        %498 = vmatpush1.bf16.msra.mxu0 %v482
        %499 = vmatprep.subr.bf16.mxu0 0
        %500 = vmatpush1.bf16.msra.mxu0 %v481
        %501 = vmatprep.subr.bf16.mxu0 0
        %502 = vmatpush1.bf16.msra.mxu0 %v480
        %503 = vmatprep.subr.bf16.mxu0 0
        %504 = vmatpush1.bf16.msra.mxu0 %v479
        %505 = vmatprep.subr.bf16.mxu0 0
        %506 = vmatpush1.bf16.msra.mxu0 %v478
        %507 = vmatprep.subr.bf16.mxu0 0
        %508 = vmatpush1.bf16.msra.mxu0 %v477
        %509 = vmatprep.subr.bf16.mxu0 0
        %510 = vmatpush2.bf16.msra.mxu0 0
        %511 = vmatprep.subr.bf16.mxu0 0
        %512 = vmatpush2.bf16.msra.mxu0 0
        %513 = vmatprep.subr.bf16.mxu0 0
        %514 = vmatpush2.bf16.msra.mxu0 0
        %515 = vmatprep.subr.bf16.mxu0 0
        %516 = vmatpush2.bf16.msra.mxu0 0
        %517 = vmatprep.subr.bf16.mxu0 0
        %518 = vmatpush2.bf16.msra.mxu0 0
        %519 = vmatprep.subr.bf16.mxu0 0
        %520 = vmatpush2.bf16.msra.mxu0 0
        %521 = vmatprep.subr.bf16.mxu0 0
        %522 = vmatpush2.bf16.msra.mxu0 0
        %523 = vmatprep.subr.bf16.mxu0 0
        %524 = vmatpush2.bf16.msra.mxu0 0
        %525 = vmatprep.mubr.bf16.mxu0 0
        %526 = vmatmul.mubr.bf16.gmra.mxu0 %v421
        %v527 = vpop.f32.mrf.mxu0
        %v528 = vadd.f32 0.0, %v527
        %v529 = vpop.f32.mrf.mxu0
        %v530 = vpop.f32.mrf.mxu0
        %v531 = vadd.f32 0.0, %v530
        %v532 = vpop.f32.mrf.mxu0
        %533 = vmatprep.mubr.bf16.mxu0 0
        %534 = vmatmul.mubr.bf16.gmra.mxu0 %v422
        %v535 = vpop.f32.mrf.mxu0
        %v536 = vadd.f32 0.0, %v535
        %v537 = vpop.f32.mrf.mxu0
        %v538 = vpop.f32.mrf.mxu0
        %v539 = vadd.f32 0.0, %v538
        %v540 = vpop.f32.mrf.mxu0
        %541 = vmatprep.mubr.bf16.mxu0 0
        %542 = vmatmul.mubr.bf16.gmra.mxu0 %v423
        %v543 = vpop.f32.mrf.mxu0
        %v544 = vadd.f32 0.0, %v543
        %v545 = vpop.f32.mrf.mxu0
        %v546 = vpop.f32.mrf.mxu0
        %v547 = vadd.f32 0.0, %v546
        %v548 = vpop.f32.mrf.mxu0
        %549 = vmatprep.mubr.bf16.mxu0 0
        %550 = vmatmul.mubr.bf16.gmra.mxu0 %v424
        %v551 = vpop.f32.mrf.mxu0
        %v552 = vadd.f32 0.0, %v551
        %v553 = vpop.f32.mrf.mxu0
        %v554 = vpop.f32.mrf.mxu0
        %v555 = vadd.f32 0.0, %v554
        %v556 = vpop.f32.mrf.mxu0
        %557 = vmatprep.mubr.bf16.mxu0 0
        %558 = vmatmul.mubr.bf16.gmra.mxu0 %v425
        %v559 = vpop.f32.mrf.mxu0
        %v560 = vadd.f32 0.0, %v559
        %v561 = vpop.f32.mrf.mxu0
        %v562 = vpop.f32.mrf.mxu0
        %v563 = vadd.f32 0.0, %v562
        %v564 = vpop.f32.mrf.mxu0
        %565 = vmatprep.mubr.bf16.mxu0 0
        %566 = vmatmul.mubr.bf16.gmra.mxu0 %v426
        %v567 = vpop.f32.mrf.mxu0
        %v568 = vadd.f32 0.0, %v567
        %v569 = vpop.f32.mrf.mxu0
        %v570 = vpop.f32.mrf.mxu0
        %v571 = vadd.f32 0.0, %v570
        %v572 = vpop.f32.mrf.mxu0
        %573 = vmatprep.mubr.bf16.mxu0 0
        %574 = vmatmul.mubr.bf16.gmra.mxu0 %v427
        %v575 = vpop.f32.mrf.mxu0
        %v576 = vadd.f32 0.0, %v575
        %v577 = vpop.f32.mrf.mxu0
        %v578 = vpop.f32.mrf.mxu0
        %v579 = vadd.f32 0.0, %v578
        %v580 = vpop.f32.mrf.mxu0
        %581 = vmatprep.mubr.bf16.mxu0 0
        %582 = vmatmul.mubr.bf16.gmra.mxu0 %v428
        %v583 = vpop.f32.mrf.mxu0
        %v584 = vadd.f32 0.0, %v583
        %v585 = vpop.f32.mrf.mxu0
        %v586 = vpop.f32.mrf.mxu0
        %v587 = vadd.f32 0.0, %v586
        %v588 = vpop.f32.mrf.mxu0
        %589 = vdwg.mxu0
        %v590 = vrot.slane %v528, 1
        %v591 = vrot.slane %v531, 1
        %v592 = vrot.slane %v536, 1
        %v593 = vrot.slane %v539, 1
        %v594 = vrot.slane %v544, 1
        %v595 = vrot.slane %v547, 1
        %v596 = vrot.slane %v552, 1
        %v597 = vrot.slane %v555, 1
        %v598 = vrot.slane %v560, 1
        %v599 = vrot.slane %v563, 1
        %v600 = vrot.slane %v568, 1
        %v601 = vrot.slane %v571, 1
        %v602 = vrot.slane %v576, 1
        %v603 = vrot.slane %v579, 1
        %v604 = vrot.slane %v584, 1
        %v605 = vrot.slane %v587, 1
        %v606 = vlaneseq
        %v607 = vshrl.u32 %v606, 7
        %vm608 = vcmp.lt.s32.totalorder %v607, 7
        %v609 = vsel %vm608, %v604, %v605
        %v610 = vsel %vm608, %v603, %v604
        %v611 = vsel %vm608, %v602, %v603
        %v612 = vsel %vm608, %v601, %v602
        %v613 = vsel %vm608, %v600, %v601
        %v614 = vsel %vm608, %v599, %v600
        %v615 = vsel %vm608, %v598, %v599
        %v616 = vsel %vm608, %v597, %v598
        %v617 = vsel %vm608, %v596, %v597
        %v618 = vsel %vm608, %v595, %v596
        %v619 = vsel %vm608, %v594, %v595
        %v620 = vsel %vm608, %v593, %v594
        %v621 = vsel %vm608, %v592, %v593
        %v622 = vsel %vm608, %v591, %v592
        %v623 = vsel %vm608, %v590, %v591
        %v624 = vsel %vm608, %v605, %v590
        %v625 = vrot.slane %v528, 2
        %v626 = vrot.slane %v531, 2
        %v627 = vrot.slane %v536, 2
        %v628 = vrot.slane %v539, 2
        %v629 = vrot.slane %v544, 2
        %v630 = vrot.slane %v547, 2
        %v631 = vrot.slane %v552, 2
        %v632 = vrot.slane %v555, 2
        %v633 = vrot.slane %v560, 2
        %v634 = vrot.slane %v563, 2
        %v635 = vrot.slane %v568, 2
        %v636 = vrot.slane %v571, 2
        %v637 = vrot.slane %v576, 2
        %v638 = vrot.slane %v579, 2
        %v639 = vrot.slane %v584, 2
        %v640 = vrot.slane %v587, 2
        %vm641 = vcmp.lt.s32.totalorder %v607, 6
        %v642 = vsel %vm641, %v639, %v640
        %v643 = vsel %vm641, %v638, %v639
        %v644 = vsel %vm641, %v637, %v638
        %v645 = vsel %vm641, %v636, %v637
        %v646 = vsel %vm641, %v635, %v636
        %v647 = vsel %vm641, %v634, %v635
        %v648 = vsel %vm641, %v633, %v634
        %v649 = vsel %vm641, %v632, %v633
        %v650 = vsel %vm641, %v631, %v632
        %v651 = vsel %vm641, %v630, %v631
        %v652 = vsel %vm641, %v629, %v630
        %v653 = vsel %vm641, %v628, %v629
        %v654 = vsel %vm641, %v627, %v628
        %v655 = vsel %vm641, %v626, %v627
        %v656 = vsel %vm641, %v625, %v626
        %v657 = vsel %vm641, %v640, %v625
        %674 = vrot.lane.b32.xlu0 %v623, 32
        %v675 = vpop.permute.xlu0 %674
        %676 = vrot.lane.b32.xlu0 %v622, 32
        %v677 = vpop.permute.xlu0 %676
        %678 = vrot.lane.b32.xlu0 %v621, 32
        %v679 = vpop.permute.xlu0 %678
        %680 = vrot.lane.b32.xlu0 %v620, 32
        %v681 = vpop.permute.xlu0 %680
        %682 = vrot.lane.b32.xlu0 %v619, 32
        %v683 = vpop.permute.xlu0 %682
        %684 = vrot.lane.b32.xlu0 %v618, 32
        %v685 = vpop.permute.xlu0 %684
        %686 = vrot.lane.b32.xlu0 %v617, 32
        %v687 = vpop.permute.xlu0 %686
        %688 = vrot.lane.b32.xlu0 %v616, 32
        %v689 = vpop.permute.xlu0 %688
        %690 = vrot.lane.b32.xlu0 %v615, 32
        %v691 = vpop.permute.xlu0 %690
        %692 = vrot.lane.b32.xlu0 %v614, 32
        %v693 = vpop.permute.xlu0 %692
        %694 = vrot.lane.b32.xlu0 %v613, 32
        %v695 = vpop.permute.xlu0 %694
        %696 = vrot.lane.b32.xlu0 %v612, 32
        %v697 = vpop.permute.xlu0 %696
        %698 = vrot.lane.b32.xlu0 %v611, 32
        %v699 = vpop.permute.xlu0 %698
        %700 = vrot.lane.b32.xlu0 %v610, 32
        %v701 = vpop.permute.xlu0 %700
        %702 = vrot.lane.b32.xlu0 %v609, 32
        %v703 = vpop.permute.xlu0 %702
        %704 = vrot.lane.b32.xlu0 %v624, 32
        %v705 = vpop.permute.xlu0 %704
        %738 = vrot.lane.b32.xlu0 %v656, 64
        %v739 = vpop.permute.xlu0 %738
        %740 = vrot.lane.b32.xlu0 %v655, 64
        %v741 = vpop.permute.xlu0 %740
        %742 = vrot.lane.b32.xlu0 %v654, 64
        %v743 = vpop.permute.xlu0 %742
        %744 = vrot.lane.b32.xlu0 %v653, 64
        %v745 = vpop.permute.xlu0 %744
        %746 = vrot.lane.b32.xlu0 %v652, 64
        %v747 = vpop.permute.xlu0 %746
        %748 = vrot.lane.b32.xlu0 %v651, 64
        %v749 = vpop.permute.xlu0 %748
        %750 = vrot.lane.b32.xlu0 %v650, 64
        %v751 = vpop.permute.xlu0 %750
        %752 = vrot.lane.b32.xlu0 %v649, 64
        %v753 = vpop.permute.xlu0 %752
        %754 = vrot.lane.b32.xlu0 %v648, 64
        %v755 = vpop.permute.xlu0 %754
        %756 = vrot.lane.b32.xlu0 %v647, 64
        %v757 = vpop.permute.xlu0 %756
        %758 = vrot.lane.b32.xlu0 %v646, 64
        %v759 = vpop.permute.xlu0 %758
        %760 = vrot.lane.b32.xlu0 %v645, 64
        %v761 = vpop.permute.xlu0 %760
        %762 = vrot.lane.b32.xlu0 %v644, 64
        %v763 = vpop.permute.xlu0 %762
        %764 = vrot.lane.b32.xlu0 %v643, 64
        %v765 = vpop.permute.xlu0 %764
        %766 = vrot.lane.b32.xlu0 %v642, 64
        %v767 = vpop.permute.xlu0 %766
        %768 = vrot.lane.b32.xlu0 %v657, 64
        %v769 = vpop.permute.xlu0 %768
        %vm786 = vcmask 261120
        %v787 = vsel %vm786, %v528, %v675
        %v788 = vsel %vm786, %v531, %v677
        %v789 = vsel %vm786, %v536, %v679
        %v790 = vsel %vm786, %v539, %v681
        %v791 = vsel %vm786, %v544, %v683
        %v792 = vsel %vm786, %v547, %v685
        %v793 = vsel %vm786, %v552, %v687
        %v794 = vsel %vm786, %v555, %v689
        %v795 = vsel %vm786, %v560, %v691
        %v796 = vsel %vm786, %v563, %v693
        %v797 = vsel %vm786, %v568, %v695
        %v798 = vsel %vm786, %v571, %v697
        %v799 = vsel %vm786, %v576, %v699
        %v800 = vsel %vm786, %v579, %v701
        %v801 = vsel %vm786, %v584, %v703
        %v802 = vsel %vm786, %v587, %v705
        %vm803 = vcmask 523264
        %v804 = vsel %vm803, %v787, %v739
        %v805 = vsel %vm803, %v788, %v741
        %v806 = vsel %vm803, %v789, %v743
        %v807 = vsel %vm803, %v790, %v745
        %v808 = vsel %vm803, %v791, %v747
        %v809 = vsel %vm803, %v792, %v749
        %v810 = vsel %vm803, %v793, %v751
        %v811 = vsel %vm803, %v794, %v753
        %v812 = vsel %vm803, %v795, %v755
        %v813 = vsel %vm803, %v796, %v757
        %v814 = vsel %vm803, %v797, %v759
        %v815 = vsel %vm803, %v798, %v761
        %v816 = vsel %vm803, %v799, %v763
        %v817 = vsel %vm803, %v800, %v765
        %v818 = vsel %vm803, %v801, %v767
        %v819 = vsel %vm803, %v802, %v769
        %v820 = vpack.c.bf16 %v805, %v804
        %v821 = vpack.c.bf16 %v807, %v806
        %v822 = vpack.c.bf16 %v809, %v808
        %v823 = vpack.c.bf16 %v811, %v810
        %v824 = vpack.c.bf16 %v813, %v812
        %v825 = vpack.c.bf16 %v815, %v814
        %v826 = vpack.c.bf16 %v817, %v816
        %v827 = vpack.c.bf16 %v819, %v818
        %v828 = vld [vmem:[%s2] sm:$0xf]
        %v829 = vld [vmem:[%s2 + $0x4] sm:$0xf]
        %v830 = vld [vmem:[%s2 + $0x8] sm:$0xf]
        %v831 = vld [vmem:[%s2 + $0xc] sm:$0xf]
        %v832 = vld [vmem:[%s2 + $0x10] sm:$0xf]
        %v833 = vld [vmem:[%s2 + $0x14] sm:$0xf]
        %v834 = vld [vmem:[%s2 + $0x18] sm:$0xf]
        %v835 = vld [vmem:[%s2 + $0x1c] sm:$0xf]
        %v836 = vld [vmem:[%s2 + $0x20] sm:$0xf]
        %v837 = vld [vmem:[%s2 + $0x24] sm:$0xf]
        %v838 = vld [vmem:[%s2 + $0x28] sm:$0xf]
        %v839 = vld [vmem:[%s2 + $0x2c] sm:$0xf]
        %v840 = vld [vmem:[%s3] sm:$0x1]
        %v842 = vlaneseq
        %v843 = vshrl.u32 %v842, 7
        %v844 = vsub.s32 0, %v843
        %v845 = vrot.slane %v840, %v844
        %v859 = vunpack.c.l.b16 %v828
        %v860 = vunpack.c.l.b16 %v829
        %v861 = vunpack.c.l.b16 %v830
        %v862 = vunpack.c.l.b16 %v831
        %v863 = vunpack.c.l.b16 %v832
        %v864 = vunpack.c.l.b16 %v833
        %v865 = vunpack.c.l.b16 %v834
        %v866 = vunpack.c.l.b16 %v835
        %v867 = vunpack.c.l.b16 %v836
        %v868 = vunpack.c.l.b16 %v837
        %v869 = vunpack.c.l.b16 %v838
        %v870 = vunpack.c.l.b16 %v839
        %v871 = vpack.c.b16 %v860, %v859
        %v872 = vpack.c.b16 %v862, %v861
        %v873 = vpack.c.b16 %v864, %v863
        %v874 = vpack.c.b16 %v866, %v865
        %v875 = vpack.c.b16 %v868, %v867
        %v876 = vpack.c.b16 %v870, %v869
        %vm883 = vcmask 785408
        %v885 = vsel %vm883, %v820, 0
        %v888 = vsel %vm883, %v821, 0
        %v891 = vsel %vm883, %v822, 0
        %v894 = vsel %vm883, %v823, 0
        %v897 = vsel %vm883, %v824, 0
        %v900 = vsel %vm883, %v825, 0
        %v903 = vsel %vm883, %v826, 0
        %v906 = vsel %vm883, %v827, 0
        %908 = vmatprep.subr.bf16.mxu0 0
        %909 = vmatpush1.bf16.msra.mxu0 0
        %910 = vmatprep.subr.bf16.mxu0 0
        %911 = vmatpush1.bf16.msra.mxu0 0
        %912 = vmatprep.subr.bf16.mxu0 0
        %913 = vmatpush1.bf16.msra.mxu0 %v876
        %914 = vmatprep.subr.bf16.mxu0 0
        %915 = vmatpush1.bf16.msra.mxu0 %v875
        %916 = vmatprep.subr.bf16.mxu0 0
        %917 = vmatpush1.bf16.msra.mxu0 %v874
        %918 = vmatprep.subr.bf16.mxu0 0
        %919 = vmatpush1.bf16.msra.mxu0 %v873
        %920 = vmatprep.subr.bf16.mxu0 0
        %921 = vmatpush1.bf16.msra.mxu0 %v872
        %922 = vmatprep.subr.bf16.mxu0 0
        %923 = vmatpush1.bf16.msra.mxu0 %v871
        %924 = vmatprep.subr.bf16.mxu0 0
        %925 = vmatpush2.bf16.msra.mxu0 0
        %926 = vmatprep.subr.bf16.mxu0 0
        %927 = vmatpush2.bf16.msra.mxu0 0
        %928 = vmatprep.subr.bf16.mxu0 0
        %929 = vmatpush2.bf16.msra.mxu0 0
        %930 = vmatprep.subr.bf16.mxu0 0
        %931 = vmatpush2.bf16.msra.mxu0 0
        %932 = vmatprep.subr.bf16.mxu0 0
        %933 = vmatpush2.bf16.msra.mxu0 0
        %934 = vmatprep.subr.bf16.mxu0 0
        %935 = vmatpush2.bf16.msra.mxu0 0
        %936 = vmatprep.subr.bf16.mxu0 0
        %937 = vmatpush2.bf16.msra.mxu0 0
        %938 = vmatprep.subr.bf16.mxu0 0
        %939 = vmatpush2.bf16.msra.mxu0 0
        %940 = vmatprep.mubr.bf16.mxu0 0
        %941 = vmatmul.mubr.bf16.gmra.mxu0 %v885
        %v942 = vpop.f32.mrf.mxu0
        %v943 = vadd.f32 %v845, %v942
        %v944 = vpop.f32.mrf.mxu0
        %v945 = vpop.f32.mrf.mxu0
        %v946 = vadd.f32 %v845, %v945
        %v947 = vpop.f32.mrf.mxu0
        %948 = vmatprep.mubr.bf16.mxu0 0
        %949 = vmatmul.mubr.bf16.gmra.mxu0 %v888
        %v950 = vpop.f32.mrf.mxu0
        %v951 = vadd.f32 %v845, %v950
        %v952 = vpop.f32.mrf.mxu0
        %v953 = vpop.f32.mrf.mxu0
        %v954 = vadd.f32 %v845, %v953
        %v955 = vpop.f32.mrf.mxu0
        %956 = vmatprep.mubr.bf16.mxu0 0
        %957 = vmatmul.mubr.bf16.gmra.mxu0 %v891
        %v958 = vpop.f32.mrf.mxu0
        %v959 = vadd.f32 %v845, %v958
        %v960 = vpop.f32.mrf.mxu0
        %v961 = vpop.f32.mrf.mxu0
        %v962 = vadd.f32 %v845, %v961
        %v963 = vpop.f32.mrf.mxu0
        %964 = vmatprep.mubr.bf16.mxu0 0
        %965 = vmatmul.mubr.bf16.gmra.mxu0 %v894
        %v966 = vpop.f32.mrf.mxu0
        %v967 = vadd.f32 %v845, %v966
        %v968 = vpop.f32.mrf.mxu0
        %v969 = vpop.f32.mrf.mxu0
        %v970 = vadd.f32 %v845, %v969
        %v971 = vpop.f32.mrf.mxu0
        %972 = vmatprep.mubr.bf16.mxu0 0
        %973 = vmatmul.mubr.bf16.gmra.mxu0 %v897
        %v974 = vpop.f32.mrf.mxu0
        %v975 = vadd.f32 %v845, %v974
        %v976 = vpop.f32.mrf.mxu0
        %v977 = vpop.f32.mrf.mxu0
        %v978 = vadd.f32 %v845, %v977
        %v979 = vpop.f32.mrf.mxu0
        %980 = vmatprep.mubr.bf16.mxu0 0
        %981 = vmatmul.mubr.bf16.gmra.mxu0 %v900
        %v982 = vpop.f32.mrf.mxu0
        %v983 = vadd.f32 %v845, %v982
        %v984 = vpop.f32.mrf.mxu0
        %v985 = vpop.f32.mrf.mxu0
        %v986 = vadd.f32 %v845, %v985
        %v987 = vpop.f32.mrf.mxu0
        %988 = vmatprep.mubr.bf16.mxu0 0
        %989 = vmatmul.mubr.bf16.gmra.mxu0 %v903
        %v990 = vpop.f32.mrf.mxu0
        %v991 = vadd.f32 %v845, %v990
        %v992 = vpop.f32.mrf.mxu0
        %v993 = vpop.f32.mrf.mxu0
        %v994 = vadd.f32 %v845, %v993
        %v995 = vpop.f32.mrf.mxu0
        %996 = vmatprep.mubr.bf16.mxu0 0
        %997 = vmatmul.mubr.bf16.gmra.mxu0 %v906
        %v998 = vpop.f32.mrf.mxu0
        %v999 = vadd.f32 %v845, %v998
        %v1000 = vpop.f32.mrf.mxu0
        %v1001 = vpop.f32.mrf.mxu0
        %v1002 = vadd.f32 %v845, %v1001
        %v1003 = vpop.f32.mrf.mxu0
        %1004 = vdwg.mxu0
        %v1005 = vmax.f32 %v943, 0.0
        %v1006 = vmax.f32 %v946, 0.0
        %v1007 = vmax.f32 %v951, 0.0
        %v1008 = vmax.f32 %v954, 0.0
        %v1009 = vmax.f32 %v959, 0.0
        %v1010 = vmax.f32 %v962, 0.0
        %v1011 = vmax.f32 %v967, 0.0
        %v1012 = vmax.f32 %v970, 0.0
        %v1013 = vmax.f32 %v975, 0.0
        %v1014 = vmax.f32 %v978, 0.0
        %v1015 = vmax.f32 %v983, 0.0
        %v1016 = vmax.f32 %v986, 0.0
        %v1017 = vmax.f32 %v991, 0.0
        %v1018 = vmax.f32 %v994, 0.0
        %v1019 = vmax.f32 %v999, 0.0
        %v1020 = vmax.f32 %v1002, 0.0
        %v1021 = vrot.slane %v1005, 1
        %v1022 = vrot.slane %v1006, 1
        %v1023 = vrot.slane %v1007, 1
        %v1024 = vrot.slane %v1008, 1
        %v1025 = vrot.slane %v1009, 1
        %v1026 = vrot.slane %v1010, 1
        %v1027 = vrot.slane %v1011, 1
        %v1028 = vrot.slane %v1012, 1
        %v1029 = vrot.slane %v1013, 1
        %v1030 = vrot.slane %v1014, 1
        %v1031 = vrot.slane %v1015, 1
        %v1032 = vrot.slane %v1016, 1
        %v1033 = vrot.slane %v1017, 1
        %v1034 = vrot.slane %v1018, 1
        %v1035 = vrot.slane %v1019, 1
        %v1036 = vrot.slane %v1020, 1
        %v1037 = vsel %vm608, %v1035, %v1036
        %v1038 = vsel %vm608, %v1034, %v1035
        %v1039 = vsel %vm608, %v1033, %v1034
        %v1040 = vsel %vm608, %v1032, %v1033
        %v1041 = vsel %vm608, %v1031, %v1032
        %v1042 = vsel %vm608, %v1030, %v1031
        %v1043 = vsel %vm608, %v1029, %v1030
        %v1044 = vsel %vm608, %v1028, %v1029
        %v1045 = vsel %vm608, %v1027, %v1028
        %v1046 = vsel %vm608, %v1026, %v1027
        %v1047 = vsel %vm608, %v1025, %v1026
        %v1048 = vsel %vm608, %v1024, %v1025
        %v1049 = vsel %vm608, %v1023, %v1024
        %v1050 = vsel %vm608, %v1022, %v1023
        %v1051 = vsel %vm608, %v1021, %v1022
        %v1052 = vsel %vm608, %v1036, %v1021
        %v1053 = vmax.f32 %v1005, %v1051
        %v1054 = vmax.f32 %v1006, %v1050
        %v1055 = vmax.f32 %v1007, %v1049
        %v1056 = vmax.f32 %v1008, %v1048
        %v1057 = vmax.f32 %v1009, %v1047
        %v1058 = vmax.f32 %v1010, %v1046
        %v1059 = vmax.f32 %v1011, %v1045
        %v1060 = vmax.f32 %v1012, %v1044
        %v1061 = vmax.f32 %v1013, %v1043
        %v1062 = vmax.f32 %v1014, %v1042
        %v1063 = vmax.f32 %v1015, %v1041
        %v1064 = vmax.f32 %v1016, %v1040
        %v1065 = vmax.f32 %v1017, %v1039
        %v1066 = vmax.f32 %v1018, %v1038
        %v1067 = vmax.f32 %v1019, %v1037
        %v1068 = vmax.f32 %v1020, %v1052
        %v1069 = vrot.slane %v1005, 2
        %v1070 = vrot.slane %v1006, 2
        %v1071 = vrot.slane %v1007, 2
        %v1072 = vrot.slane %v1008, 2
        %v1073 = vrot.slane %v1009, 2
        %v1074 = vrot.slane %v1010, 2
        %v1075 = vrot.slane %v1011, 2
        %v1076 = vrot.slane %v1012, 2
        %v1077 = vrot.slane %v1013, 2
        %v1078 = vrot.slane %v1014, 2
        %v1079 = vrot.slane %v1015, 2
        %v1080 = vrot.slane %v1016, 2
        %v1081 = vrot.slane %v1017, 2
        %v1082 = vrot.slane %v1018, 2
        %v1083 = vrot.slane %v1019, 2
        %v1084 = vrot.slane %v1020, 2
        %v1085 = vsel %vm641, %v1083, %v1084
        %v1086 = vsel %vm641, %v1082, %v1083
        %v1087 = vsel %vm641, %v1081, %v1082
        %v1088 = vsel %vm641, %v1080, %v1081
        %v1089 = vsel %vm641, %v1079, %v1080
        %v1090 = vsel %vm641, %v1078, %v1079
        %v1091 = vsel %vm641, %v1077, %v1078
        %v1092 = vsel %vm641, %v1076, %v1077
        %v1093 = vsel %vm641, %v1075, %v1076
        %v1094 = vsel %vm641, %v1074, %v1075
        %v1095 = vsel %vm641, %v1073, %v1074
        %v1096 = vsel %vm641, %v1072, %v1073
        %v1097 = vsel %vm641, %v1071, %v1072
        %v1098 = vsel %vm641, %v1070, %v1071
        %v1099 = vsel %vm641, %v1069, %v1070
        %v1100 = vsel %vm641, %v1084, %v1069
        %v1101 = vmax.f32 %v1053, %v1099
        %v1102 = vmax.f32 %v1054, %v1098
        %v1103 = vmax.f32 %v1055, %v1097
        %v1104 = vmax.f32 %v1056, %v1096
        %v1105 = vmax.f32 %v1057, %v1095
        %v1106 = vmax.f32 %v1058, %v1094
        %v1107 = vmax.f32 %v1059, %v1093
        %v1108 = vmax.f32 %v1060, %v1092
        %v1109 = vmax.f32 %v1061, %v1091
        %v1110 = vmax.f32 %v1062, %v1090
        %v1111 = vmax.f32 %v1063, %v1089
        %v1112 = vmax.f32 %v1064, %v1088
        %v1113 = vmax.f32 %v1065, %v1087
        %v1114 = vmax.f32 %v1066, %v1086
        %v1115 = vmax.f32 %v1067, %v1085
        %v1116 = vmax.f32 %v1068, %v1100
        %v1117 = vpack.c.bf16 %v1102, %v1101
        %v1118 = vpack.c.bf16 %v1104, %v1103
        %v1119 = vpack.c.bf16 %v1106, %v1105
        %v1120 = vpack.c.bf16 %v1108, %v1107
        %v1121 = vpack.c.bf16 %v1110, %v1109
        %v1122 = vpack.c.bf16 %v1112, %v1111
        %v1123 = vpack.c.bf16 %v1114, %v1113
        %v1124 = vpack.c.bf16 %v1116, %v1115
        %v1125 = vld [vmem:[%s4] sm:$0xf]
        %v1126 = vld [vmem:[%s4 + $0x4] sm:$0xf]
        %v1127 = vld [vmem:[%s4 + $0x8] sm:$0xf]
        %v1128 = vld [vmem:[%s4 + $0xc] sm:$0xf]
        %v1129 = vld [vmem:[%s4 + $0x10] sm:$0xf]
        %v1130 = vld [vmem:[%s4 + $0x14] sm:$0xf]
        %v1131 = vld [vmem:[%s4 + $0x18] sm:$0xf]
        %v1132 = vld [vmem:[%s4 + $0x1c] sm:$0xf]
        %v1133 = vld [vmem:[%s4 + $0x20] sm:$0xf]
        %v1134 = vld [vmem:[%s4 + $0x24] sm:$0xf]
        %v1135 = vld [vmem:[%s4 + $0x28] sm:$0xf]
        %v1136 = vld [vmem:[%s4 + $0x2c] sm:$0xf]
        %v1137 = vld [vmem:[%s4 + $0x30] sm:$0xf]
        %v1138 = vld [vmem:[%s4 + $0x34] sm:$0xf]
        %v1139 = vld [vmem:[%s4 + $0x38] sm:$0xf]
        %v1140 = vld [vmem:[%s4 + $0x3c] sm:$0xf]
        %v1141 = vrot.slane %v1101, 1
        %v1142 = vrot.slane %v1102, 1
        %v1143 = vrot.slane %v1103, 1
        %v1144 = vrot.slane %v1104, 1
        %v1145 = vrot.slane %v1105, 1
        %v1146 = vrot.slane %v1106, 1
        %v1147 = vrot.slane %v1107, 1
        %v1148 = vrot.slane %v1108, 1
        %v1149 = vrot.slane %v1109, 1
        %v1150 = vrot.slane %v1110, 1
        %v1151 = vrot.slane %v1111, 1
        %v1152 = vrot.slane %v1112, 1
        %v1153 = vrot.slane %v1113, 1
        %v1154 = vrot.slane %v1114, 1
        %v1155 = vrot.slane %v1115, 1
        %v1156 = vrot.slane %v1116, 1
        %v1157 = vsel %vm608, %v1155, %v1156
        %v1158 = vsel %vm608, %v1154, %v1155
        %v1159 = vsel %vm608, %v1153, %v1154
        %v1160 = vsel %vm608, %v1152, %v1153
        %v1161 = vsel %vm608, %v1151, %v1152
        %v1162 = vsel %vm608, %v1150, %v1151
        %v1163 = vsel %vm608, %v1149, %v1150
        %v1164 = vsel %vm608, %v1148, %v1149
        %v1165 = vsel %vm608, %v1147, %v1148
        %v1166 = vsel %vm608, %v1146, %v1147
        %v1167 = vsel %vm608, %v1145, %v1146
        %v1168 = vsel %vm608, %v1144, %v1145
        %v1169 = vsel %vm608, %v1143, %v1144
        %v1170 = vsel %vm608, %v1142, %v1143
        %v1171 = vsel %vm608, %v1141, %v1142
        %v1172 = vsel %vm608, %v1156, %v1141
        %v1173 = vpack.c.bf16 %v1170, %v1171
        %v1174 = vpack.c.bf16 %v1168, %v1169
        %v1175 = vpack.c.bf16 %v1166, %v1167
        %v1176 = vpack.c.bf16 %v1164, %v1165
        %v1177 = vpack.c.bf16 %v1162, %v1163
        %v1178 = vpack.c.bf16 %v1160, %v1161
        %v1179 = vpack.c.bf16 %v1158, %v1159
        %v1180 = vpack.c.bf16 %v1172, %v1157
        %s1181 = scalar_lea.vmem %s4, 64
        %v1182 = vld [vmem:[%s1181] sm:$0xf]
        %v1183 = vld [vmem:[%s1181 + $0x4] sm:$0xf]
        %v1184 = vld [vmem:[%s1181 + $0x8] sm:$0xf]
        %v1185 = vld [vmem:[%s1181 + $0xc] sm:$0xf]
        %v1186 = vld [vmem:[%s1181 + $0x10] sm:$0xf]
        %v1187 = vld [vmem:[%s1181 + $0x14] sm:$0xf]
        %v1188 = vld [vmem:[%s1181 + $0x18] sm:$0xf]
        %v1189 = vld [vmem:[%s1181 + $0x1c] sm:$0xf]
        %v1190 = vld [vmem:[%s1181 + $0x20] sm:$0xf]
        %v1191 = vld [vmem:[%s1181 + $0x24] sm:$0xf]
        %v1192 = vld [vmem:[%s1181 + $0x28] sm:$0xf]
        %v1193 = vld [vmem:[%s1181 + $0x2c] sm:$0xf]
        %v1194 = vld [vmem:[%s1181 + $0x30] sm:$0xf]
        %v1195 = vld [vmem:[%s1181 + $0x34] sm:$0xf]
        %v1196 = vld [vmem:[%s1181 + $0x38] sm:$0xf]
        %v1197 = vld [vmem:[%s1181 + $0x3c] sm:$0xf]
        %v1214 = vunpack.c.l.b16 %v1182
        %v1215 = vunpack.c.l.b16 %v1183
        %v1216 = vunpack.c.l.b16 %v1184
        %v1217 = vunpack.c.l.b16 %v1185
        %v1218 = vunpack.c.l.b16 %v1186
        %v1219 = vunpack.c.l.b16 %v1187
        %v1220 = vunpack.c.l.b16 %v1188
        %v1221 = vunpack.c.l.b16 %v1189
        %v1222 = vunpack.c.l.b16 %v1190
        %v1223 = vunpack.c.l.b16 %v1191
        %v1224 = vunpack.c.l.b16 %v1192
        %v1225 = vunpack.c.l.b16 %v1193
        %v1226 = vunpack.c.l.b16 %v1194
        %v1227 = vunpack.c.l.b16 %v1195
        %v1228 = vunpack.c.l.b16 %v1196
        %v1229 = vunpack.c.l.b16 %v1197
        %v1230 = vpack.c.b16 %v1215, %v1214
        %v1231 = vpack.c.b16 %v1217, %v1216
        %v1232 = vpack.c.b16 %v1219, %v1218
        %v1233 = vpack.c.b16 %v1221, %v1220
        %v1234 = vpack.c.b16 %v1223, %v1222
        %v1235 = vpack.c.b16 %v1225, %v1224
        %v1236 = vpack.c.b16 %v1227, %v1226
        %v1237 = vpack.c.b16 %v1229, %v1228
        %1246 = vmatprep.subr.bf16.mxu0 0
        %1247 = vmatpush1.bf16.msra.mxu0 %v1237
        %1248 = vmatprep.subr.bf16.mxu0 0
        %1249 = vmatpush1.bf16.msra.mxu0 %v1236
        %1250 = vmatprep.subr.bf16.mxu0 0
        %1251 = vmatpush1.bf16.msra.mxu0 %v1235
        %1252 = vmatprep.subr.bf16.mxu0 0
        %1253 = vmatpush1.bf16.msra.mxu0 %v1234
        %1254 = vmatprep.subr.bf16.mxu0 0
        %1255 = vmatpush1.bf16.msra.mxu0 %v1233
        %1256 = vmatprep.subr.bf16.mxu0 0
        %1257 = vmatpush1.bf16.msra.mxu0 %v1232
        %1258 = vmatprep.subr.bf16.mxu0 0
        %1259 = vmatpush1.bf16.msra.mxu0 %v1231
        %1260 = vmatprep.subr.bf16.mxu0 0
        %1261 = vmatpush1.bf16.msra.mxu0 %v1230
        %1262 = vmatprep.subr.bf16.mxu0 0
        %1263 = vmatpush2.bf16.msra.mxu0 0
        %1264 = vmatprep.subr.bf16.mxu0 0
        %1265 = vmatpush2.bf16.msra.mxu0 0
        %1266 = vmatprep.subr.bf16.mxu0 0
        %1267 = vmatpush2.bf16.msra.mxu0 0
        %1268 = vmatprep.subr.bf16.mxu0 0
        %1269 = vmatpush2.bf16.msra.mxu0 0
        %1270 = vmatprep.subr.bf16.mxu0 0
        %1271 = vmatpush2.bf16.msra.mxu0 0
        %1272 = vmatprep.subr.bf16.mxu0 0
        %1273 = vmatpush2.bf16.msra.mxu0 0
        %1274 = vmatprep.subr.bf16.mxu0 0
        %1275 = vmatpush2.bf16.msra.mxu0 0
        %1276 = vmatprep.subr.bf16.mxu0 0
        %1277 = vmatpush2.bf16.msra.mxu0 0
        %1278 = vmatprep.mubr.bf16.mxu0 0
        %1279 = vmatmul.mubr.bf16.gmra.mxu0 %v1173
        %v1280 = vpop.f32.mrf.mxu0
        %v1281 = vadd.f32 0.0, %v1280
        %v1282 = vpop.f32.mrf.mxu0
        %v1283 = vpop.f32.mrf.mxu0
        %v1284 = vadd.f32 0.0, %v1283
        %v1285 = vpop.f32.mrf.mxu0
        %1286 = vmatprep.mubr.bf16.mxu0 0
        %1287 = vmatmul.mubr.bf16.gmra.mxu0 %v1174
        %v1288 = vpop.f32.mrf.mxu0
        %v1289 = vadd.f32 0.0, %v1288
        %v1290 = vpop.f32.mrf.mxu0
        %v1291 = vpop.f32.mrf.mxu0
        %v1292 = vadd.f32 0.0, %v1291
        %v1293 = vpop.f32.mrf.mxu0
        %1294 = vmatprep.mubr.bf16.mxu0 0
        %1295 = vmatmul.mubr.bf16.gmra.mxu0 %v1175
        %v1296 = vpop.f32.mrf.mxu0
        %v1297 = vadd.f32 0.0, %v1296
        %v1298 = vpop.f32.mrf.mxu0
        %v1299 = vpop.f32.mrf.mxu0
        %v1300 = vadd.f32 0.0, %v1299
        %v1301 = vpop.f32.mrf.mxu0
        %1302 = vmatprep.mubr.bf16.mxu0 0
        %1303 = vmatmul.mubr.bf16.gmra.mxu0 %v1176
        %v1304 = vpop.f32.mrf.mxu0
        %v1305 = vadd.f32 0.0, %v1304
        %v1306 = vpop.f32.mrf.mxu0
        %v1307 = vpop.f32.mrf.mxu0
        %v1308 = vadd.f32 0.0, %v1307
        %v1309 = vpop.f32.mrf.mxu0
        %1310 = vmatprep.mubr.bf16.mxu0 0
        %1311 = vmatmul.mubr.bf16.gmra.mxu0 %v1177
        %v1312 = vpop.f32.mrf.mxu0
        %v1313 = vadd.f32 0.0, %v1312
        %v1314 = vpop.f32.mrf.mxu0
        %v1315 = vpop.f32.mrf.mxu0
        %v1316 = vadd.f32 0.0, %v1315
        %v1317 = vpop.f32.mrf.mxu0
        %1318 = vmatprep.mubr.bf16.mxu0 0
        %1319 = vmatmul.mubr.bf16.gmra.mxu0 %v1178
        %v1320 = vpop.f32.mrf.mxu0
        %v1321 = vadd.f32 0.0, %v1320
        %v1322 = vpop.f32.mrf.mxu0
        %v1323 = vpop.f32.mrf.mxu0
        %v1324 = vadd.f32 0.0, %v1323
        %v1325 = vpop.f32.mrf.mxu0
        %1326 = vmatprep.mubr.bf16.mxu0 0
        %1327 = vmatmul.mubr.bf16.gmra.mxu0 %v1179
        %v1328 = vpop.f32.mrf.mxu0
        %v1329 = vadd.f32 0.0, %v1328
        %v1330 = vpop.f32.mrf.mxu0
        %v1331 = vpop.f32.mrf.mxu0
        %v1332 = vadd.f32 0.0, %v1331
        %v1333 = vpop.f32.mrf.mxu0
        %1334 = vmatprep.mubr.bf16.mxu0 0
        %1335 = vmatmul.mubr.bf16.gmra.mxu0 %v1180
        %v1336 = vpop.f32.mrf.mxu0
        %v1337 = vadd.f32 0.0, %v1336
        %v1338 = vpop.f32.mrf.mxu0
        %v1339 = vpop.f32.mrf.mxu0
        %v1340 = vadd.f32 0.0, %v1339
        %v1341 = vpop.f32.mrf.mxu0
        %1342 = vdwg.mxu0
        %v1359 = vunpack.c.l.b16 %v1125
        %v1360 = vunpack.c.l.b16 %v1126
        %v1361 = vunpack.c.l.b16 %v1127
        %v1362 = vunpack.c.l.b16 %v1128
        %v1363 = vunpack.c.l.b16 %v1129
        %v1364 = vunpack.c.l.b16 %v1130
        %v1365 = vunpack.c.l.b16 %v1131
        %v1366 = vunpack.c.l.b16 %v1132
        %v1367 = vunpack.c.l.b16 %v1133
        %v1368 = vunpack.c.l.b16 %v1134
        %v1369 = vunpack.c.l.b16 %v1135
        %v1370 = vunpack.c.l.b16 %v1136
        %v1371 = vunpack.c.l.b16 %v1137
        %v1372 = vunpack.c.l.b16 %v1138
        %v1373 = vunpack.c.l.b16 %v1139
        %v1374 = vunpack.c.l.b16 %v1140
        %v1375 = vpack.c.b16 %v1360, %v1359
        %v1376 = vpack.c.b16 %v1362, %v1361
        %v1377 = vpack.c.b16 %v1364, %v1363
        %v1378 = vpack.c.b16 %v1366, %v1365
        %v1379 = vpack.c.b16 %v1368, %v1367
        %v1380 = vpack.c.b16 %v1370, %v1369
        %v1381 = vpack.c.b16 %v1372, %v1371
        %v1382 = vpack.c.b16 %v1374, %v1373
        %1391 = vmatprep.subr.bf16.mxu0 0
        %1392 = vmatpush1.bf16.msra.mxu0 %v1382
        %1393 = vmatprep.subr.bf16.mxu0 0
        %1394 = vmatpush1.bf16.msra.mxu0 %v1381
        %1395 = vmatprep.subr.bf16.mxu0 0
        %1396 = vmatpush1.bf16.msra.mxu0 %v1380
        %1397 = vmatprep.subr.bf16.mxu0 0
        %1398 = vmatpush1.bf16.msra.mxu0 %v1379
        %1399 = vmatprep.subr.bf16.mxu0 0
        %1400 = vmatpush1.bf16.msra.mxu0 %v1378
        %1401 = vmatprep.subr.bf16.mxu0 0
        %1402 = vmatpush1.bf16.msra.mxu0 %v1377
        %1403 = vmatprep.subr.bf16.mxu0 0
        %1404 = vmatpush1.bf16.msra.mxu0 %v1376
        %1405 = vmatprep.subr.bf16.mxu0 0
        %1406 = vmatpush1.bf16.msra.mxu0 %v1375
        %1407 = vmatprep.subr.bf16.mxu0 0
        %1408 = vmatpush2.bf16.msra.mxu0 0
        %1409 = vmatprep.subr.bf16.mxu0 0
        %1410 = vmatpush2.bf16.msra.mxu0 0
        %1411 = vmatprep.subr.bf16.mxu0 0
        %1412 = vmatpush2.bf16.msra.mxu0 0
        %1413 = vmatprep.subr.bf16.mxu0 0
        %1414 = vmatpush2.bf16.msra.mxu0 0
        %1415 = vmatprep.subr.bf16.mxu0 0
        %1416 = vmatpush2.bf16.msra.mxu0 0
        %1417 = vmatprep.subr.bf16.mxu0 0
        %1418 = vmatpush2.bf16.msra.mxu0 0
        %1419 = vmatprep.subr.bf16.mxu0 0
        %1420 = vmatpush2.bf16.msra.mxu0 0
        %1421 = vmatprep.subr.bf16.mxu0 0
        %1422 = vmatpush2.bf16.msra.mxu0 0
        %1423 = vmatprep.mubr.bf16.mxu0 0
        %1424 = vmatmul.mubr.bf16.gmra.mxu0 %v1117
        %v1425 = vpop.f32.mrf.mxu0
        %v1426 = vadd.f32 %v1281, %v1425
        %v1427 = vpop.f32.mrf.mxu0
        %v1428 = vpop.f32.mrf.mxu0
        %v1429 = vadd.f32 %v1284, %v1428
        %v1430 = vpop.f32.mrf.mxu0
        %1431 = vmatprep.mubr.bf16.mxu0 0
        %1432 = vmatmul.mubr.bf16.gmra.mxu0 %v1118
        %v1433 = vpop.f32.mrf.mxu0
        %v1434 = vadd.f32 %v1289, %v1433
        %v1435 = vpop.f32.mrf.mxu0
        %v1436 = vpop.f32.mrf.mxu0
        %v1437 = vadd.f32 %v1292, %v1436
        %v1438 = vpop.f32.mrf.mxu0
        %1439 = vmatprep.mubr.bf16.mxu0 0
        %1440 = vmatmul.mubr.bf16.gmra.mxu0 %v1119
        %v1441 = vpop.f32.mrf.mxu0
        %v1442 = vadd.f32 %v1297, %v1441
        %v1443 = vpop.f32.mrf.mxu0
        %v1444 = vpop.f32.mrf.mxu0
        %v1445 = vadd.f32 %v1300, %v1444
        %v1446 = vpop.f32.mrf.mxu0
        %1447 = vmatprep.mubr.bf16.mxu0 0
        %1448 = vmatmul.mubr.bf16.gmra.mxu0 %v1120
        %v1449 = vpop.f32.mrf.mxu0
        %v1450 = vadd.f32 %v1305, %v1449
        %v1451 = vpop.f32.mrf.mxu0
        %v1452 = vpop.f32.mrf.mxu0
        %v1453 = vadd.f32 %v1308, %v1452
        %v1454 = vpop.f32.mrf.mxu0
        %1455 = vmatprep.mubr.bf16.mxu0 0
        %1456 = vmatmul.mubr.bf16.gmra.mxu0 %v1121
        %v1457 = vpop.f32.mrf.mxu0
        %v1458 = vadd.f32 %v1313, %v1457
        %v1459 = vpop.f32.mrf.mxu0
        %v1460 = vpop.f32.mrf.mxu0
        %v1461 = vadd.f32 %v1316, %v1460
        %v1462 = vpop.f32.mrf.mxu0
        %1463 = vmatprep.mubr.bf16.mxu0 0
        %1464 = vmatmul.mubr.bf16.gmra.mxu0 %v1122
        %v1465 = vpop.f32.mrf.mxu0
        %v1466 = vadd.f32 %v1321, %v1465
        %v1467 = vpop.f32.mrf.mxu0
        %v1468 = vpop.f32.mrf.mxu0
        %v1469 = vadd.f32 %v1324, %v1468
        %v1470 = vpop.f32.mrf.mxu0
        %1471 = vmatprep.mubr.bf16.mxu0 0
        %1472 = vmatmul.mubr.bf16.gmra.mxu0 %v1123
        %v1473 = vpop.f32.mrf.mxu0
        %v1474 = vadd.f32 %v1329, %v1473
        %v1475 = vpop.f32.mrf.mxu0
        %v1476 = vpop.f32.mrf.mxu0
        %v1477 = vadd.f32 %v1332, %v1476
        %v1478 = vpop.f32.mrf.mxu0
        %1479 = vmatprep.mubr.bf16.mxu0 0
        %1480 = vmatmul.mubr.bf16.gmra.mxu0 %v1124
        %v1481 = vpop.f32.mrf.mxu0
        %v1482 = vadd.f32 %v1337, %v1481
        %v1483 = vpop.f32.mrf.mxu0
        %v1484 = vpop.f32.mrf.mxu0
        %v1485 = vadd.f32 %v1340, %v1484
        %v1486 = vpop.f32.mrf.mxu0
        %1487 = vdwg.mxu0
        %v1488 = vrot.slane %v1101, 2
        %v1489 = vrot.slane %v1102, 2
        %v1490 = vrot.slane %v1103, 2
        %v1491 = vrot.slane %v1104, 2
        %v1492 = vrot.slane %v1105, 2
        %v1493 = vrot.slane %v1106, 2
        %v1494 = vrot.slane %v1107, 2
        %v1495 = vrot.slane %v1108, 2
        %v1496 = vrot.slane %v1109, 2
        %v1497 = vrot.slane %v1110, 2
        %v1498 = vrot.slane %v1111, 2
        %v1499 = vrot.slane %v1112, 2
        %v1500 = vrot.slane %v1113, 2
        %v1501 = vrot.slane %v1114, 2
        %v1502 = vrot.slane %v1115, 2
        %v1503 = vrot.slane %v1116, 2
        %v1504 = vsel %vm641, %v1502, %v1503
        %v1505 = vsel %vm641, %v1501, %v1502
        %v1506 = vsel %vm641, %v1500, %v1501
        %v1507 = vsel %vm641, %v1499, %v1500
        %v1508 = vsel %vm641, %v1498, %v1499
        %v1509 = vsel %vm641, %v1497, %v1498
        %v1510 = vsel %vm641, %v1496, %v1497
        %v1511 = vsel %vm641, %v1495, %v1496
        %v1512 = vsel %vm641, %v1494, %v1495
        %v1513 = vsel %vm641, %v1493, %v1494
        %v1514 = vsel %vm641, %v1492, %v1493
        %v1515 = vsel %vm641, %v1491, %v1492
        %v1516 = vsel %vm641, %v1490, %v1491
        %v1517 = vsel %vm641, %v1489, %v1490
        %v1518 = vsel %vm641, %v1488, %v1489
        %v1519 = vsel %vm641, %v1503, %v1488
        %v1520 = vpack.c.bf16 %v1517, %v1518
        %v1521 = vpack.c.bf16 %v1515, %v1516
        %v1522 = vpack.c.bf16 %v1513, %v1514
        %v1523 = vpack.c.bf16 %v1511, %v1512
        %v1524 = vpack.c.bf16 %v1509, %v1510
        %v1525 = vpack.c.bf16 %v1507, %v1508
        %v1526 = vpack.c.bf16 %v1505, %v1506
        %v1527 = vpack.c.bf16 %v1519, %v1504
        %s1528 = scalar_lea.vmem %s4, 128
        %v1529 = vld [vmem:[%s1528] sm:$0xf]
        %v1530 = vld [vmem:[%s1528 + $0x4] sm:$0xf]
        %v1531 = vld [vmem:[%s1528 + $0x8] sm:$0xf]
        %v1532 = vld [vmem:[%s1528 + $0xc] sm:$0xf]
        %v1533 = vld [vmem:[%s1528 + $0x10] sm:$0xf]
        %v1534 = vld [vmem:[%s1528 + $0x14] sm:$0xf]
        %v1535 = vld [vmem:[%s1528 + $0x18] sm:$0xf]
        %v1536 = vld [vmem:[%s1528 + $0x1c] sm:$0xf]
        %v1537 = vld [vmem:[%s1528 + $0x20] sm:$0xf]
        %v1538 = vld [vmem:[%s1528 + $0x24] sm:$0xf]
        %v1539 = vld [vmem:[%s1528 + $0x28] sm:$0xf]
        %v1540 = vld [vmem:[%s1528 + $0x2c] sm:$0xf]
        %v1541 = vld [vmem:[%s1528 + $0x30] sm:$0xf]
        %v1542 = vld [vmem:[%s1528 + $0x34] sm:$0xf]
        %v1543 = vld [vmem:[%s1528 + $0x38] sm:$0xf]
        %v1544 = vld [vmem:[%s1528 + $0x3c] sm:$0xf]
        %v1561 = vunpack.c.l.b16 %v1529
        %v1562 = vunpack.c.l.b16 %v1530
        %v1563 = vunpack.c.l.b16 %v1531
        %v1564 = vunpack.c.l.b16 %v1532
        %v1565 = vunpack.c.l.b16 %v1533
        %v1566 = vunpack.c.l.b16 %v1534
        %v1567 = vunpack.c.l.b16 %v1535
        %v1568 = vunpack.c.l.b16 %v1536
        %v1569 = vunpack.c.l.b16 %v1537
        %v1570 = vunpack.c.l.b16 %v1538
        %v1571 = vunpack.c.l.b16 %v1539
        %v1572 = vunpack.c.l.b16 %v1540
        %v1573 = vunpack.c.l.b16 %v1541
        %v1574 = vunpack.c.l.b16 %v1542
        %v1575 = vunpack.c.l.b16 %v1543
        %v1576 = vunpack.c.l.b16 %v1544
        %v1577 = vpack.c.b16 %v1562, %v1561
        %v1578 = vpack.c.b16 %v1564, %v1563
        %v1579 = vpack.c.b16 %v1566, %v1565
        %v1580 = vpack.c.b16 %v1568, %v1567
        %v1581 = vpack.c.b16 %v1570, %v1569
        %v1582 = vpack.c.b16 %v1572, %v1571
        %v1583 = vpack.c.b16 %v1574, %v1573
        %v1584 = vpack.c.b16 %v1576, %v1575
        %1593 = vmatprep.subr.bf16.mxu0 0
        %1594 = vmatpush1.bf16.msra.mxu0 %v1584
        %1595 = vmatprep.subr.bf16.mxu0 0
        %1596 = vmatpush1.bf16.msra.mxu0 %v1583
        %1597 = vmatprep.subr.bf16.mxu0 0
        %1598 = vmatpush1.bf16.msra.mxu0 %v1582
        %1599 = vmatprep.subr.bf16.mxu0 0
        %1600 = vmatpush1.bf16.msra.mxu0 %v1581
        %1601 = vmatprep.subr.bf16.mxu0 0
        %1602 = vmatpush1.bf16.msra.mxu0 %v1580
        %1603 = vmatprep.subr.bf16.mxu0 0
        %1604 = vmatpush1.bf16.msra.mxu0 %v1579
        %1605 = vmatprep.subr.bf16.mxu0 0
        %1606 = vmatpush1.bf16.msra.mxu0 %v1578
        %1607 = vmatprep.subr.bf16.mxu0 0
        %1608 = vmatpush1.bf16.msra.mxu0 %v1577
        %1609 = vmatprep.subr.bf16.mxu0 0
        %1610 = vmatpush2.bf16.msra.mxu0 0
        %1611 = vmatprep.subr.bf16.mxu0 0
        %1612 = vmatpush2.bf16.msra.mxu0 0
        %1613 = vmatprep.subr.bf16.mxu0 0
        %1614 = vmatpush2.bf16.msra.mxu0 0
        %1615 = vmatprep.subr.bf16.mxu0 0
        %1616 = vmatpush2.bf16.msra.mxu0 0
        %1617 = vmatprep.subr.bf16.mxu0 0
        %1618 = vmatpush2.bf16.msra.mxu0 0
        %1619 = vmatprep.subr.bf16.mxu0 0
        %1620 = vmatpush2.bf16.msra.mxu0 0
        %1621 = vmatprep.subr.bf16.mxu0 0
        %1622 = vmatpush2.bf16.msra.mxu0 0
        %1623 = vmatprep.subr.bf16.mxu0 0
        %1624 = vmatpush2.bf16.msra.mxu0 0
        %1625 = vmatprep.mubr.bf16.mxu0 0
        %1626 = vmatmul.mubr.bf16.gmra.mxu0 %v1520
        %v1627 = vpop.f32.mrf.mxu0
        %v1628 = vadd.f32 0.0, %v1627
        %v1629 = vpop.f32.mrf.mxu0
        %v1630 = vpop.f32.mrf.mxu0
        %v1631 = vadd.f32 0.0, %v1630
        %v1632 = vpop.f32.mrf.mxu0
        %1633 = vmatprep.mubr.bf16.mxu0 0
        %1634 = vmatmul.mubr.bf16.gmra.mxu0 %v1521
        %v1635 = vpop.f32.mrf.mxu0
        %v1636 = vadd.f32 0.0, %v1635
        %v1637 = vpop.f32.mrf.mxu0
        %v1638 = vpop.f32.mrf.mxu0
        %v1639 = vadd.f32 0.0, %v1638
        %v1640 = vpop.f32.mrf.mxu0
        %1641 = vmatprep.mubr.bf16.mxu0 0
        %1642 = vmatmul.mubr.bf16.gmra.mxu0 %v1522
        %v1643 = vpop.f32.mrf.mxu0
        %v1644 = vadd.f32 0.0, %v1643
        %v1645 = vpop.f32.mrf.mxu0
        %v1646 = vpop.f32.mrf.mxu0
        %v1647 = vadd.f32 0.0, %v1646
        %v1648 = vpop.f32.mrf.mxu0
        %1649 = vmatprep.mubr.bf16.mxu0 0
        %1650 = vmatmul.mubr.bf16.gmra.mxu0 %v1523
        %v1651 = vpop.f32.mrf.mxu0
        %v1652 = vadd.f32 0.0, %v1651
        %v1653 = vpop.f32.mrf.mxu0
        %v1654 = vpop.f32.mrf.mxu0
        %v1655 = vadd.f32 0.0, %v1654
        %v1656 = vpop.f32.mrf.mxu0
        %1657 = vmatprep.mubr.bf16.mxu0 0
        %1658 = vmatmul.mubr.bf16.gmra.mxu0 %v1524
        %v1659 = vpop.f32.mrf.mxu0
        %v1660 = vadd.f32 0.0, %v1659
        %v1661 = vpop.f32.mrf.mxu0
        %v1662 = vpop.f32.mrf.mxu0
        %v1663 = vadd.f32 0.0, %v1662
        %v1664 = vpop.f32.mrf.mxu0
        %1665 = vmatprep.mubr.bf16.mxu0 0
        %1666 = vmatmul.mubr.bf16.gmra.mxu0 %v1525
        %v1667 = vpop.f32.mrf.mxu0
        %v1668 = vadd.f32 0.0, %v1667
        %v1669 = vpop.f32.mrf.mxu0
        %v1670 = vpop.f32.mrf.mxu0
        %v1671 = vadd.f32 0.0, %v1670
        %v1672 = vpop.f32.mrf.mxu0
        %1673 = vmatprep.mubr.bf16.mxu0 0
        %1674 = vmatmul.mubr.bf16.gmra.mxu0 %v1526
        %v1675 = vpop.f32.mrf.mxu0
        %v1676 = vadd.f32 0.0, %v1675
        %v1677 = vpop.f32.mrf.mxu0
        %v1678 = vpop.f32.mrf.mxu0
        %v1679 = vadd.f32 0.0, %v1678
        %v1680 = vpop.f32.mrf.mxu0
        %1681 = vmatprep.mubr.bf16.mxu0 0
        %1682 = vmatmul.mubr.bf16.gmra.mxu0 %v1527
        %v1683 = vpop.f32.mrf.mxu0
        %v1684 = vadd.f32 0.0, %v1683
        %v1685 = vpop.f32.mrf.mxu0
        %v1686 = vpop.f32.mrf.mxu0
        %v1687 = vadd.f32 0.0, %v1686
        %v1688 = vpop.f32.mrf.mxu0
        %1689 = vdwg.mxu0
        %v1690 = vadd.f32 %v1426, %v1628
        %v1691 = vadd.f32 %v1429, %v1631
        %v1692 = vadd.f32 %v1434, %v1636
        %v1693 = vadd.f32 %v1437, %v1639
        %v1694 = vadd.f32 %v1442, %v1644
        %v1695 = vadd.f32 %v1445, %v1647
        %v1696 = vadd.f32 %v1450, %v1652
        %v1697 = vadd.f32 %v1453, %v1655
        %v1698 = vadd.f32 %v1458, %v1660
        %v1699 = vadd.f32 %v1461, %v1663
        %v1700 = vadd.f32 %v1466, %v1668
        %v1701 = vadd.f32 %v1469, %v1671
        %v1702 = vadd.f32 %v1474, %v1676
        %v1703 = vadd.f32 %v1477, %v1679
        %v1704 = vadd.f32 %v1482, %v1684
        %v1705 = vadd.f32 %v1485, %v1687
        %v1706 = vld [vmem:[%s5] sm:$0x1]
        %v1708 = vlaneseq
        %v1709 = vshrl.u32 %v1708, 7
        %v1710 = vsub.s32 0, %v1709
        %v1711 = vrot.slane %v1706, %v1710
        %v1713 = vadd.f32 %v1690, %v1711
        %v1714 = vadd.f32 %v1691, %v1711
        %v1715 = vadd.f32 %v1692, %v1711
        %v1716 = vadd.f32 %v1693, %v1711
        %v1717 = vadd.f32 %v1694, %v1711
        %v1718 = vadd.f32 %v1695, %v1711
        %v1719 = vadd.f32 %v1696, %v1711
        %v1720 = vadd.f32 %v1697, %v1711
        %v1721 = vadd.f32 %v1698, %v1711
        %v1722 = vadd.f32 %v1699, %v1711
        %v1723 = vadd.f32 %v1700, %v1711
        %v1724 = vadd.f32 %v1701, %v1711
        %v1725 = vadd.f32 %v1702, %v1711
        %v1726 = vadd.f32 %v1703, %v1711
        %v1727 = vadd.f32 %v1704, %v1711
        %v1728 = vadd.f32 %v1705, %v1711
        %v1729 = vmax.f32 %v1713, 0.0
        %v1730 = vmax.f32 %v1714, 0.0
        %v1731 = vmax.f32 %v1715, 0.0
        %v1732 = vmax.f32 %v1716, 0.0
        %v1733 = vmax.f32 %v1717, 0.0
        %v1734 = vmax.f32 %v1718, 0.0
        %v1735 = vmax.f32 %v1719, 0.0
        %v1736 = vmax.f32 %v1720, 0.0
        %v1737 = vmax.f32 %v1721, 0.0
        %v1738 = vmax.f32 %v1722, 0.0
        %v1739 = vmax.f32 %v1723, 0.0
        %v1740 = vmax.f32 %v1724, 0.0
        %v1741 = vmax.f32 %v1725, 0.0
        %v1742 = vmax.f32 %v1726, 0.0
        %v1743 = vmax.f32 %v1727, 0.0
        %v1744 = vmax.f32 %v1728, 0.0
        %v1745 = vrot.slane %v1729, 1
        %v1746 = vrot.slane %v1730, 1
        %v1747 = vrot.slane %v1731, 1
        %v1748 = vrot.slane %v1732, 1
        %v1749 = vrot.slane %v1733, 1
        %v1750 = vrot.slane %v1734, 1
        %v1751 = vrot.slane %v1735, 1
        %v1752 = vrot.slane %v1736, 1
        %v1753 = vrot.slane %v1737, 1
        %v1754 = vrot.slane %v1738, 1
        %v1755 = vrot.slane %v1739, 1
        %v1756 = vrot.slane %v1740, 1
        %v1757 = vrot.slane %v1741, 1
        %v1758 = vrot.slane %v1742, 1
        %v1759 = vrot.slane %v1743, 1
        %v1760 = vrot.slane %v1744, 1
        %v1761 = vsel %vm608, %v1759, %v1760
        %v1762 = vsel %vm608, %v1757, %v1758
        %v1763 = vsel %vm608, %v1755, %v1756
        %v1764 = vsel %vm608, %v1753, %v1754
        %v1765 = vsel %vm608, %v1751, %v1752
        %v1766 = vsel %vm608, %v1749, %v1750
        %v1767 = vsel %vm608, %v1747, %v1748
        %v1768 = vsel %vm608, %v1745, %v1746
        %v1769 = vmax.f32 %v1729, %v1768
        %v1770 = vmax.f32 %v1731, %v1767
        %v1771 = vmax.f32 %v1733, %v1766
        %v1772 = vmax.f32 %v1735, %v1765
        %v1773 = vmax.f32 %v1737, %v1764
        %v1774 = vmax.f32 %v1739, %v1763
        %v1775 = vmax.f32 %v1741, %v1762
        %v1776 = vmax.f32 %v1743, %v1761
        %v1777 = vrot.slane %v1729, 2
        %v1778 = vrot.slane %v1730, 2
        %v1779 = vrot.slane %v1731, 2
        %v1780 = vrot.slane %v1732, 2
        %v1781 = vrot.slane %v1733, 2
        %v1782 = vrot.slane %v1734, 2
        %v1783 = vrot.slane %v1735, 2
        %v1784 = vrot.slane %v1736, 2
        %v1785 = vrot.slane %v1737, 2
        %v1786 = vrot.slane %v1738, 2
        %v1787 = vrot.slane %v1739, 2
        %v1788 = vrot.slane %v1740, 2
        %v1789 = vrot.slane %v1741, 2
        %v1790 = vrot.slane %v1742, 2
        %v1791 = vrot.slane %v1743, 2
        %v1792 = vrot.slane %v1744, 2
        %v1793 = vsel %vm641, %v1791, %v1792
        %v1794 = vsel %vm641, %v1789, %v1790
        %v1795 = vsel %vm641, %v1787, %v1788
        %v1796 = vsel %vm641, %v1785, %v1786
        %v1797 = vsel %vm641, %v1783, %v1784
        %v1798 = vsel %vm641, %v1781, %v1782
        %v1799 = vsel %vm641, %v1779, %v1780
        %v1800 = vsel %vm641, %v1777, %v1778
        %v1801 = vmax.f32 %v1769, %v1800
        %v1802 = vmax.f32 %v1770, %v1799
        %v1803 = vmax.f32 %v1771, %v1798
        %v1804 = vmax.f32 %v1772, %v1797
        %v1805 = vmax.f32 %v1773, %v1796
        %v1806 = vmax.f32 %v1774, %v1795
        %v1807 = vmax.f32 %v1775, %v1794
        %v1808 = vmax.f32 %v1776, %v1793
        %v1809 = vsel %vm786, %v1801, -inf
        %v1810 = vrot.slane %v1809, 4
        %v1811 = vmax.f32 %v1809, %v1810
        %v1812 = vrot.slane %v1811, 2
        %v1813 = vmax.f32 %v1811, %v1812
        %v1814 = vrot.slane %v1813, 1
        %v1815 = vmax.f32 %v1813, %v1814
        %v1816 = vsel %vm786, %v1802, -inf
        %v1817 = vrot.slane %v1816, 4
        %v1818 = vmax.f32 %v1816, %v1817
        %v1819 = vrot.slane %v1818, 2
        %v1820 = vmax.f32 %v1818, %v1819
        %v1821 = vrot.slane %v1820, 1
        %v1822 = vmax.f32 %v1820, %v1821
        %v1823 = vsel %vm786, %v1803, -inf
        %v1824 = vrot.slane %v1823, 4
        %v1825 = vmax.f32 %v1823, %v1824
        %v1826 = vrot.slane %v1825, 2
        %v1827 = vmax.f32 %v1825, %v1826
        %v1828 = vrot.slane %v1827, 1
        %v1829 = vmax.f32 %v1827, %v1828
        %v1830 = vsel %vm786, %v1804, -inf
        %v1831 = vrot.slane %v1830, 4
        %v1832 = vmax.f32 %v1830, %v1831
        %v1833 = vrot.slane %v1832, 2
        %v1834 = vmax.f32 %v1832, %v1833
        %v1835 = vrot.slane %v1834, 1
        %v1836 = vmax.f32 %v1834, %v1835
        %v1837 = vsel %vm786, %v1805, -inf
        %v1838 = vrot.slane %v1837, 4
        %v1839 = vmax.f32 %v1837, %v1838
        %v1840 = vrot.slane %v1839, 2
        %v1841 = vmax.f32 %v1839, %v1840
        %v1842 = vrot.slane %v1841, 1
        %v1843 = vmax.f32 %v1841, %v1842
        %v1844 = vsel %vm786, %v1806, -inf
        %v1845 = vrot.slane %v1844, 4
        %v1846 = vmax.f32 %v1844, %v1845
        %v1847 = vrot.slane %v1846, 2
        %v1848 = vmax.f32 %v1846, %v1847
        %v1849 = vrot.slane %v1848, 1
        %v1850 = vmax.f32 %v1848, %v1849
        %v1851 = vsel %vm786, %v1807, -inf
        %v1852 = vrot.slane %v1851, 4
        %v1853 = vmax.f32 %v1851, %v1852
        %v1854 = vrot.slane %v1853, 2
        %v1855 = vmax.f32 %v1853, %v1854
        %v1856 = vrot.slane %v1855, 1
        %v1857 = vmax.f32 %v1855, %v1856
        %v1858 = vsel %vm786, %v1808, -inf
        %v1859 = vrot.slane %v1858, 4
        %v1860 = vmax.f32 %v1858, %v1859
        %v1861 = vrot.slane %v1860, 2
        %v1862 = vmax.f32 %v1860, %v1861
        %v1863 = vrot.slane %v1862, 1
        %v1864 = vmax.f32 %v1862, %v1863
        %v1865 = vld [vmem:[%s6] sm:$0xff]
        %v1866 = vld [vmem:[%s6 + $0x8] sm:$0xff]
        %v1867 = vld [vmem:[%s6 + $0x10] sm:$0xff]
        %v1868 = vld [vmem:[%s6 + $0x18] sm:$0xff]
        %v1869 = vld [vmem:[%s7] sm:$0x1]
        %v1871 = vlaneseq
        %v1872 = vshrl.u32 %v1871, 7
        %v1873 = vsub.s32 0, %v1872
        %v1874 = vrot.slane %v1869, %v1873
        %vm1884 = vcmask 1041409
        %v1885 = vsel %vm1884, %v1822, %v1815
        %vm1886 = vcmask 1042434
        %v1887 = vsel %vm1886, %v1829, %v1885
        %vm1888 = vcmask 1043459
        %v1889 = vsel %vm1888, %v1836, %v1887
        %vm1890 = vcmask 1044484
        %v1891 = vsel %vm1890, %v1843, %v1889
        %vm1892 = vcmask 1045509
        %v1893 = vsel %vm1892, %v1850, %v1891
        %vm1894 = vcmask 1046534
        %v1895 = vsel %vm1894, %v1857, %v1893
        %vm1896 = vcmask 1047559
        %v1897 = vsel %vm1896, %v1864, %v1895
        %v1898 = vsel %vm786, %v1897, 0
        %1900 = vmatprep.subr.mxu0 0.0
        %1901 = vmatpush1.msra.mxu0 0.0
        %1902 = vmatprep.subr.mxu0 0.0
        %1903 = vmatpush1.msra.mxu0 0.0
        %1904 = vmatprep.subr.mxu0 0.0
        %1905 = vmatpush1.msra.mxu0 0.0
        %1906 = vmatprep.subr.mxu0 0.0
        %1907 = vmatpush1.msra.mxu0 0.0
        %1908 = vmatprep.subr.mxu0 0.0
        %1909 = vmatpush1.msra.mxu0 0.0
        %1910 = vmatprep.subr.mxu0 0.0
        %1911 = vmatpush1.msra.mxu0 0.0
        %1912 = vmatprep.subr.mxu0 0.0
        %1913 = vmatpush1.msra.mxu0 0.0
        %1914 = vmatprep.subr.mxu0 0.0
        %1915 = vmatpush1.msra.mxu0 0.0
        %1916 = vmatprep.subr.mxu0 0.0
        %1917 = vmatpush1.msra.mxu0 0.0
        %1918 = vmatprep.subr.mxu0 0.0
        %1919 = vmatpush1.msra.mxu0 0.0
        %1920 = vmatprep.subr.mxu0 0.0
        %1921 = vmatpush1.msra.mxu0 0.0
        %1922 = vmatprep.subr.mxu0 0.0
        %1923 = vmatpush1.msra.mxu0 0.0
        %1924 = vmatprep.subr.mxu0 0.0
        %1925 = vmatpush1.msra.mxu0 %v1868
        %1926 = vmatprep.subr.mxu0 0.0
        %1927 = vmatpush1.msra.mxu0 %v1867
        %1928 = vmatprep.subr.mxu0 0.0
        %1929 = vmatpush1.msra.mxu0 %v1866
        %1930 = vmatprep.subr.mxu0 0.0
        %1931 = vmatpush1.msra.mxu0 %v1865
        %1932 = vmatprep.subr.mxu0 0.0
        %1933 = vmatpush2.msra.mxu0 0.0
        %1934 = vmatprep.subr.mxu0 0.0
        %1935 = vmatpush2.msra.mxu0 0.0
        %1936 = vmatprep.subr.mxu0 0.0
        %1937 = vmatpush2.msra.mxu0 0.0
        %1938 = vmatprep.subr.mxu0 0.0
        %1939 = vmatpush2.msra.mxu0 0.0
        %1940 = vmatprep.subr.mxu0 0.0
        %1941 = vmatpush2.msra.mxu0 0.0
        %1942 = vmatprep.subr.mxu0 0.0
        %1943 = vmatpush2.msra.mxu0 0.0
        %1944 = vmatprep.subr.mxu0 0.0
        %1945 = vmatpush2.msra.mxu0 0.0
        %1946 = vmatprep.subr.mxu0 0.0
        %1947 = vmatpush2.msra.mxu0 0.0
        %1948 = vmatprep.subr.mxu0 0.0
        %1949 = vmatpush2.msra.mxu0 0.0
        %1950 = vmatprep.subr.mxu0 0.0
        %1951 = vmatpush2.msra.mxu0 0.0
        %1952 = vmatprep.subr.mxu0 0.0
        %1953 = vmatpush2.msra.mxu0 0.0
        %1954 = vmatprep.subr.mxu0 0.0
        %1955 = vmatpush2.msra.mxu0 0.0
        %1956 = vmatprep.subr.mxu0 0.0
        %1957 = vmatpush2.msra.mxu0 0.0
        %1958 = vmatprep.subr.mxu0 0.0
        %1959 = vmatpush2.msra.mxu0 0.0
        %1960 = vmatprep.subr.mxu0 0.0
        %1961 = vmatpush2.msra.mxu0 0.0
        %1962 = vmatprep.subr.mxu0 0.0
        %1963 = vmatpush2.msra.mxu0 0.0
        %1964 = vmatprep.mubr.f32.mxu0 0.0
        %1965 = vmatmul.mubr.f32.gmra.mxu0 %v1898
        %v1966 = vpop.f32.mrf.mxu0
        %v1967 = vadd.f32 %v1874, %v1966
        %v1968 = vpop.f32.mrf.mxu0
        %1969 = vdwg.mxu0
        %1970 = vst.msk [vmem:[%s299] sm:$0xff] %vm786, %v1967
        %s1971 = sand.u32 %s203, 1
        %s1972 = scalar_lea.sflag [#allocation3], %s1971
        %s1973 = sand.u32 %s203, 1
        %s1974 = smul.addr %s1973, 8
        %s1975 = scalar_lea.vmem [#allocation2], %s1974
        // Predicated region
        $region53: #{tpu_custom_call.1} parent=51 // pred_check
          %p1976 = pneg %p213
        $region54: #{tpu_custom_call.1} parent=51 // pred_check_branch
          %1978 = sbr.rel (%p1976) target = $region56
        $region55: #{tpu_custom_call.1} parent=51 // pred_region
          %s1980 = ssub.s32 128, 128
          %1981 = vsyncadd %s1972, %s1980
          %s1982 = smul.addr %s22, 128
          %s1983 = scalar_lea.hbm %s8, %s1982
          %s1985 = sshll.u32 %s1975, 4
          %s1986 = int_to_ptr.vmem [resolvable:$true] %s1985
          %1988 = dma.vmem_to_hbm [thread:$0]  %s1986, 128, %s1983, %s1972
        $region56: #{tpu_custom_call.1} parent=51 // pred_fallthru
          _
      $region52: #{tpu_custom_call.1} parent=5 // pred_fallthru
        _
      %p1989 = scmp.le.s32.totalorder 2, %s17
      // Predicated region
      $region57: #{tpu_custom_call.1} parent=5 // pred_check
        %p1990 = pneg %p1989
      $region58: #{tpu_custom_call.1} parent=5 // pred_check_branch
        %1992 = sbr.rel (%p1990) target = $region60
      $region59: #{tpu_custom_call.1} parent=5 // pred_region
        %s1993 = ssub.s32 %s17, 2
        // Predicated region
        $region61: #{tpu_custom_call.1} parent=59 // pred_check
          %p1994 = pneg %p219
        $region62: #{tpu_custom_call.1} parent=59 // pred_check_branch
          %1996 = sbr.rel (%p1994) target = $region64
        $region63: #{tpu_custom_call.1} parent=59 // pred_region
          %s1997 = sand.u32 %s204, 1
          %s1998 = scalar_lea.sflag [#allocation3], %s1997
          %s1999 = sand.u32 %s204, 1
          %s2000 = smul.addr %s1999, 8
          %s2001 = scalar_lea.vmem [#allocation2], %s2000
          %2002 = dma.done %s1998, 128
        $region64: #{tpu_custom_call.1} parent=59 // pred_fallthru
          _
      $region60: #{tpu_custom_call.1} parent=5 // pred_fallthru
        _
    $region6: #{tpu_custom_call.1} parent=1 // loop_footer
      %s21 = sadd.s32 1, %s17
    $region7: #{tpu_custom_call.1} parent=1 // loop_footer_branch
      %16 = sbr.rel target = $region3
    $region8: #{tpu_custom_call.1} parent=1 // loop_exit
      _
    %2003 = vsyncpa [#allocation3], 1
    %s2004 = scalar_lea.sflag [#allocation3], 1
    %2005 = vsyncpa %s2004, 1

</llo_original>
